<compile_context>
chip_gen: v7x
topology: tpu7x:2x2x1
jax: 0.10.0
libtpu: 0.0.40
codegen_flags: <defaults>
</compile_context>

<pallas_src>
import functools

import jax
import jax.numpy as jnp
from jax import lax
from jax.experimental import pallas as pl
from jax.experimental.pallas import tpu as pltpu

EPS = 1e-5


def _residual_block_kernel(x_ref,
                           wt1_ref, b1_ref, g1_ref, be1_ref,
                           wt2_ref, b2_ref, g2_ref, be2_ref,
                           pool_ref, poolT_ref,
                           out_ref, *, n, h, w, c):
    nh = n * h
    wc = w * c
    inv_cnt = 1.0 / float(n * h * w)

    x = x_ref[...]                                            # (NH, WC) f32

    # Within-image row index -> masks zeroing rows whose kh-shifted source
    # falls outside the image (realizes the H-direction SAME zero padding).
    rid = lax.broadcasted_iota(jnp.int32, (n, h, wc), 1).reshape(nh, wc)
    not_top = rid != 0            # kh=0 reads row ho-1: invalid on first row
    not_bot = rid != (h - 1)      # kh=2 reads row ho+1: invalid on last row

    def conv3x3(a_f32, wt_ref, b_row):
        # 3x3 SAME conv == 3 row-shifted (NH,WC) x (WC,WC) matmuls against
        # block-Toeplitz weight slabs (kw taps + W-padding folded into K).
        zero = jnp.zeros_like(a_f32)
        top = jnp.where(not_top, pltpu.roll(a_f32, shift=1, axis=0), zero)
        bot = jnp.where(not_bot, pltpu.roll(a_f32, shift=nh - 1, axis=0),
                        zero)                                  # shift == -1
        acc = jnp.dot(top.astype(jnp.bfloat16), wt_ref[0],
                      preferred_element_type=jnp.float32)
        acc += jnp.dot(a_f32.astype(jnp.bfloat16), wt_ref[1],
                       preferred_element_type=jnp.float32)
        acc += jnp.dot(bot.astype(jnp.bfloat16), wt_ref[2],
                       preferred_element_type=jnp.float32)
        # NOTE: the conv bias is mathematically cancelled by the batch-mean
        # subtraction of the following training-mode BN; it is kept (one
        # cheap VPU add) for fidelity with the PyTorch module.
        return acc + b_row

    def batchnorm(y, g_row, be_row):
        # Training-mode BN over all (N,H,W) positions, biased variance.
        # Per-channel stats gathered from the W*C lane axis with one pooling
        # matmul (sum & sumsq share the MXU pass); gamma/beta folded into a
        # single scale/shift pair broadcast back with one more tiny matmul.
        col_s = jnp.sum(y, axis=0, keepdims=True)                 # (1, WC)
        col_sq = jnp.sum(y * y, axis=0, keepdims=True)            # (1, WC)
        stats = jnp.concatenate([col_s, col_sq], axis=0)          # (2, WC)
        pooled = jnp.dot(stats, pool_ref[...],
                         preferred_element_type=jnp.float32)      # (2, C)
        mean = pooled[0:1, :] * inv_cnt
        var = pooled[1:2, :] * inv_cnt - mean * mean
        scale_c = g_row * lax.rsqrt(var + EPS)                    # (1, C)
        shift_c = be_row - mean * scale_c                         # (1, C)
        ss = jnp.concatenate([scale_c, shift_c], axis=0)          # (2, C)
        ss_wc = jnp.dot(ss, poolT_ref[...],
                        preferred_element_type=jnp.float32)       # (2, WC)
        return y * ss_wc[0:1, :] + ss_wc[1:2, :]

    # conv1 -> bn1 -> relu
    y = conv3x3(x, wt1_ref, b1_ref[...])
    y = jnp.maximum(batchnorm(y, g1_ref[...], be1_ref[...]), 0.0)

    # conv2 -> bn2 -> +residual -> relu
    z = conv3x3(y, wt2_ref, b2_ref[...])
    z = batchnorm(z, g2_ref[...], be2_ref[...])
    out_ref[...] = jnp.maximum(z + x, 0.0).astype(out_ref.dtype)


def _toeplitz_conv_weights(w_flat, W_, C_):
    """(9*Cin, Cout) HWIO-flattened 3x3 weights -> (3, W*C, W*C) bf16 slabs.

    Slab kh satisfies:  wt[kh][wi*C+ci, wo*C+co] = w[kh, kw, ci, co]
    with wi = wo + kw - 1 (entries falling outside [0, W) are absent, which
    realizes the W-direction zero padding of the SAME conv).
    """
    w4 = w_flat.reshape(3, 3, C_, C_).astype(jnp.float32)        # kh,kw,ci,co
    wi = jnp.arange(W_)[None, :, None]
    wo = jnp.arange(W_)[None, None, :]
    kw = jnp.arange(3)[:, None, None]
    sel = (wi == wo + kw - 1).astype(jnp.float32)                # (kw, wi, wo)
    wt = jnp.einsum('qio,kqab->kiaob', sel, w4)                  # kh,wi,ci,wo,co
    return wt.reshape(3, W_ * C_, W_ * C_).astype(jnp.bfloat16)


@jax.jit
def residual_block(x_nchw, w1, b1, g1, be1, w2, b2, g2, be2):
    """x_nchw: (N, C, H, W) float32.  Returns (N, C, H, W) float32."""
    N, C, H, W = x_nchw.shape
    WC = W * C

    # NCHW -> (N*H, W*C) lane-dense slab (w-major, c-minor on lanes).
    x2 = jnp.transpose(x_nchw, (0, 2, 3, 1)).astype(jnp.float32).reshape(N * H, WC)

    wt1 = _toeplitz_conv_weights(w1, W, C)
    wt2 = _toeplitz_conv_weights(w2, W, C)
    b1_wc = jnp.tile(b1.astype(jnp.float32), W).reshape(1, WC)
    b2_wc = jnp.tile(b2.astype(jnp.float32), W).reshape(1, WC)
    row = lambda v: v.reshape(1, C).astype(jnp.float32)
    pool = jnp.tile(jnp.eye(C, dtype=jnp.float32), (W, 1))       # (WC, C)
    poolT = pool.T                                               # (C, WC)

    vmem = pl.BlockSpec(memory_space=pltpu.MemorySpace.VMEM)
    kernel = functools.partial(_residual_block_kernel, n=N, h=H, w=W, c=C)

    out2 = pl.pallas_call(
        kernel,
        out_shape=jax.ShapeDtypeStruct((N * H, WC), jnp.float32),
        in_specs=[vmem] * 11,
        out_specs=vmem,
        compiler_params=pltpu.CompilerParams(
            vmem_limit_bytes=32 * 1024 * 1024),
    )(x2, wt1, b1_wc, row(g1), row(be1),
      wt2, b2_wc, row(g2), row(be2), pool, poolT)

    out = out2.reshape(N, H, W, C)
    return jnp.transpose(out, (0, 3, 1, 2))


def _reference(x_nchw, w1, b1, g1, be1, w2, b2, g2, be2):
    """Pure-JAX f32 reference of the PyTorch forward (training-mode BN)."""
    x = jnp.transpose(x_nchw, (0, 2, 3, 1)).astype(jnp.float32)
    C = x.shape[-1]

    def conv(v, w_flat, b):
        w = w_flat.reshape(3, 3, C, C)
        y = lax.conv_general_dilated(
            v, w, window_strides=(1, 1), padding="SAME",
            dimension_numbers=("NHWC", "HWIO", "NHWC"))
        return y + b.reshape(1, 1, 1, C)

    def bn(v, g, b):
        mean = v.mean(axis=(0, 1, 2), keepdims=True)
        var = ((v - mean) ** 2).mean(axis=(0, 1, 2), keepdims=True)
        return (v - mean) * lax.rsqrt(var + EPS) * g.reshape(1, 1, 1, C) \
            + b.reshape(1, 1, 1, C)

    out = jnp.maximum(bn(conv(x, w1, b1), g1, be1), 0.0)
    out = bn(conv(out, w2, b2), g2, be2) + x
    out = jnp.maximum(out, 0.0)
    return jnp.transpose(out, (0, 3, 1, 2))


if __name__ == "__main__":
    N, C, H, W = 2, 4, 16, 16

    key = jax.random.PRNGKey(0)
    kx, kw1, kb1, kw2, kb2, kg1, kbe1, kg2, kbe2 = jax.random.split(key, 9)

    x = jax.random.normal(kx, (N, C, H, W), jnp.float32)

    # conv weights flattened to (9*Cin, Cout); biases / BN affine params (C,)
    w1 = jax.random.normal(kw1, (9 * C, C), jnp.float32) * 0.2
    b1 = jax.random.normal(kb1, (C,), jnp.float32) * 0.1
    w2 = jax.random.normal(kw2, (9 * C, C), jnp.float32) * 0.2
    b2 = jax.random.normal(kb2, (C,), jnp.float32) * 0.1
    g1 = 1.0 + 0.1 * jax.random.normal(kg1, (C,), jnp.float32)
    be1 = 0.1 * jax.random.normal(kbe1, (C,), jnp.float32)
    g2 = 1.0 + 0.1 * jax.random.normal(kg2, (C,), jnp.float32)
    be2 = 0.1 * jax.random.normal(kbe2, (C,), jnp.float32)

    out = jax.block_until_ready(
        residual_block(x, w1, b1, g1, be1, w2, b2, g2, be2))
    ref = jax.block_until_ready(
        _reference(x, w1, b1, g1, be1, w2, b2, g2, be2))

    assert out.shape == (N, C, H, W)
    maxdiff = float(jnp.max(jnp.abs(out - ref)))
    # Kernel uses bf16 MXU operands; f32 reference -> few-1e-3 abs deviation.
    assert jnp.allclose(out, ref, rtol=5e-2, atol=5e-2), maxdiff

    print("KERNEL_OK")
</pallas_src>

<mosaic_0001>
module attributes {stable_mosaic.version = 11 : i64} {
  func.func @_residual_block_kernel(%arg0: memref<32x64xf32, #tpu.memory_space<vmem>>, %arg1: memref<3x64x64xbf16, #tpu.memory_space<vmem>>, %arg2: memref<1x64xf32, #tpu.memory_space<vmem>>, %arg3: memref<1x4xf32, #tpu.memory_space<vmem>>, %arg4: memref<1x4xf32, #tpu.memory_space<vmem>>, %arg5: memref<3x64x64xbf16, #tpu.memory_space<vmem>>, %arg6: memref<1x64xf32, #tpu.memory_space<vmem>>, %arg7: memref<1x4xf32, #tpu.memory_space<vmem>>, %arg8: memref<1x4xf32, #tpu.memory_space<vmem>>, %arg9: memref<64x4xf32, #tpu.memory_space<vmem>>, %arg10: memref<4x64xf32, #tpu.memory_space<vmem>>, %arg11: memref<32x64xf32, #tpu.memory_space<vmem>>) attributes {dimension_semantics = [], scalar_prefetch = 0 : i64, scratch_operands = 0 : i64, tpu.core_type = #tpu.core_type<tc>} {
    %c0 = arith.constant 0 : index
    %c0_0 = arith.constant 0 : index
    %0 = vector.load %arg0[%c0, %c0_0] : memref<32x64xf32, #tpu.memory_space<vmem>>, vector<32x64xf32>
    %1 = tpu.iota {dimensions = array<i32: 1>} : vector<2x16x64xi32>
    %2 = vector.shape_cast %1 : vector<2x16x64xi32> to vector<32x64xi32>
    %c0_i32 = arith.constant 0 : i32
    %3 = vector.broadcast %c0_i32 : i32 to vector<32x64xi32>
    %4 = arith.cmpi ne, %2, %3 : vector<32x64xi32>
    %c15_i32 = arith.constant 15 : i32
    %5 = vector.broadcast %c15_i32 : i32 to vector<32x64xi32>
    %6 = arith.cmpi ne, %2, %5 : vector<32x64xi32>
    %c0_1 = arith.constant 0 : index
    %c0_2 = arith.constant 0 : index
    %7 = vector.load %arg2[%c0_1, %c0_2] : memref<1x64xf32, #tpu.memory_space<vmem>>, vector<1x64xf32>
    %cst = arith.constant 0.000000e+00 : f32
    %8 = vector.broadcast %cst : f32 to vector<32x64xf32>
    %c1_i32 = arith.constant 1 : i32
    %9 = tpu.dynamic_rotate %0 by %c1_i32 dim 0 : vector<32x64xf32>, i32 -> vector<32x64xf32>
    %10 = arith.select %4, %9, %8 : vector<32x64xi1>, vector<32x64xf32>
    %c31_i32 = arith.constant 31 : i32
    %11 = tpu.dynamic_rotate %0 by %c31_i32 dim 0 : vector<32x64xf32>, i32 -> vector<32x64xf32>
    %12 = arith.select %6, %11, %8 : vector<32x64xi1>, vector<32x64xf32>
    %13 = arith.truncf %10 : vector<32x64xf32> to vector<32x64xbf16>
    %c0_3 = arith.constant 0 : index
    %c0_4 = arith.constant 0 : index
    %c0_5 = arith.constant 0 : index
    %14 = vector.load %arg1[%c0_3, %c0_4, %c0_5] : memref<3x64x64xbf16, #tpu.memory_space<vmem>>, vector<1x64x64xbf16>
    %15 = vector.shape_cast %14 : vector<1x64x64xbf16> to vector<64x64xbf16>
    %cst_6 = arith.constant dense<0.000000e+00> : vector<32x64xf32>
    %16 = tpu.matmul %13, %15, %cst_6 {dimension_numbers = #tpu.dot_dimension_numbers<[1], [0], [0], [1], [0, 0, 1, 1], [], []>} : vector<32x64xbf16>, vector<64x64xbf16>, vector<32x64xf32> -> vector<32x64xf32>
    %17 = arith.truncf %0 : vector<32x64xf32> to vector<32x64xbf16>
    %c1 = arith.constant 1 : index
    %c0_7 = arith.constant 0 : index
    %c0_8 = arith.constant 0 : index
    %18 = vector.load %arg1[%c1, %c0_7, %c0_8] : memref<3x64x64xbf16, #tpu.memory_space<vmem>>, vector<1x64x64xbf16>
    %19 = vector.shape_cast %18 : vector<1x64x64xbf16> to vector<64x64xbf16>
    %cst_9 = arith.constant dense<0.000000e+00> : vector<32x64xf32>
    %20 = tpu.matmul %17, %19, %cst_9 {dimension_numbers = #tpu.dot_dimension_numbers<[1], [0], [0], [1], [0, 0, 1, 1], [], []>} : vector<32x64xbf16>, vector<64x64xbf16>, vector<32x64xf32> -> vector<32x64xf32>
    %21 = arith.addf %16, %20 : vector<32x64xf32>
    %22 = arith.truncf %12 : vector<32x64xf32> to vector<32x64xbf16>
    %c2 = arith.constant 2 : index
    %c0_10 = arith.constant 0 : index
    %c0_11 = arith.constant 0 : index
    %23 = vector.load %arg1[%c2, %c0_10, %c0_11] : memref<3x64x64xbf16, #tpu.memory_space<vmem>>, vector<1x64x64xbf16>
    %24 = vector.shape_cast %23 : vector<1x64x64xbf16> to vector<64x64xbf16>
    %cst_12 = arith.constant dense<0.000000e+00> : vector<32x64xf32>
    %25 = tpu.matmul %22, %24, %cst_12 {dimension_numbers = #tpu.dot_dimension_numbers<[1], [0], [0], [1], [0, 0, 1, 1], [], []>} : vector<32x64xbf16>, vector<64x64xbf16>, vector<32x64xf32> -> vector<32x64xf32>
    %26 = arith.addf %21, %25 : vector<32x64xf32>
    %27 = vector.broadcast %7 : vector<1x64xf32> to vector<32x64xf32>
    %28 = arith.addf %26, %27 : vector<32x64xf32>
    %c0_13 = arith.constant 0 : index
    %c0_14 = arith.constant 0 : index
    %29 = vector.load %arg3[%c0_13, %c0_14] : memref<1x4xf32, #tpu.memory_space<vmem>>, vector<1x4xf32>
    %c0_15 = arith.constant 0 : index
    %c0_16 = arith.constant 0 : index
    %30 = vector.load %arg4[%c0_15, %c0_16] : memref<1x4xf32, #tpu.memory_space<vmem>>, vector<1x4xf32>
    %cst_17 = arith.constant dense<0.000000e+00> : vector<64xf32>
    %31 = vector.multi_reduction <add>, %28, %cst_17 [0] : vector<32x64xf32> to vector<64xf32>
    %32 = vector.shape_cast %31 : vector<64xf32> to vector<1x64xf32>
    %33 = arith.mulf %28, %28 : vector<32x64xf32>
    %cst_18 = arith.constant dense<0.000000e+00> : vector<64xf32>
    %34 = vector.multi_reduction <add>, %33, %cst_18 [0] : vector<32x64xf32> to vector<64xf32>
    %35 = vector.shape_cast %34 : vector<64xf32> to vector<1x64xf32>
    %36 = tpu.concatenate %32, %35 in 0 : vector<1x64xf32>, vector<1x64xf32> -> vector<2x64xf32>
    %c0_19 = arith.constant 0 : index
    %c0_20 = arith.constant 0 : index
    %37 = vector.load %arg9[%c0_19, %c0_20] : memref<64x4xf32, #tpu.memory_space<vmem>>, vector<64x4xf32>
    %cst_21 = arith.constant dense<0.000000e+00> : vector<2x4xf32>
    %38 = tpu.matmul %36, %37, %cst_21 {dimension_numbers = #tpu.dot_dimension_numbers<[1], [0], [0], [1], [0, 0, 1, 1], [], []>} : vector<2x64xf32>, vector<64x4xf32>, vector<2x4xf32> -> vector<2x4xf32>
    %39 = vector.extract_strided_slice %38 {offsets = [0, 0], sizes = [1, 4], strides = [1, 1]} : vector<2x4xf32> to vector<1x4xf32>
    %cst_22 = arith.constant 0.001953125 : f32
    %40 = vector.broadcast %cst_22 : f32 to vector<1x4xf32>
    %41 = arith.mulf %39, %40 : vector<1x4xf32>
    %42 = vector.extract_strided_slice %38 {offsets = [1, 0], sizes = [1, 4], strides = [1, 1]} : vector<2x4xf32> to vector<1x4xf32>
    %cst_23 = arith.constant 0.001953125 : f32
    %43 = vector.broadcast %cst_23 : f32 to vector<1x4xf32>
    %44 = arith.mulf %42, %43 : vector<1x4xf32>
    %45 = arith.mulf %41, %41 : vector<1x4xf32>
    %46 = arith.subf %44, %45 : vector<1x4xf32>
    %cst_24 = arith.constant 9.99999974E-6 : f32
    %47 = vector.broadcast %cst_24 : f32 to vector<1x4xf32>
    %48 = arith.addf %46, %47 : vector<1x4xf32>
    %49 = math.rsqrt %48 : vector<1x4xf32>
    %50 = arith.mulf %29, %49 : vector<1x4xf32>
    %51 = arith.mulf %41, %50 : vector<1x4xf32>
    %52 = arith.subf %30, %51 : vector<1x4xf32>
    %53 = tpu.concatenate %50, %52 in 0 : vector<1x4xf32>, vector<1x4xf32> -> vector<2x4xf32>
    %c0_25 = arith.constant 0 : index
    %c0_26 = arith.constant 0 : index
    %54 = vector.load %arg10[%c0_25, %c0_26] : memref<4x64xf32, #tpu.memory_space<vmem>>, vector<4x64xf32>
    %cst_27 = arith.constant dense<0.000000e+00> : vector<2x64xf32>
    %55 = tpu.matmul %53, %54, %cst_27 {dimension_numbers = #tpu.dot_dimension_numbers<[1], [0], [0], [1], [0, 0, 1, 1], [], []>} : vector<2x4xf32>, vector<4x64xf32>, vector<2x64xf32> -> vector<2x64xf32>
    %56 = vector.extract_strided_slice %55 {offsets = [0, 0], sizes = [1, 64], strides = [1, 1]} : vector<2x64xf32> to vector<1x64xf32>
    %57 = vector.broadcast %56 : vector<1x64xf32> to vector<32x64xf32>
    %58 = arith.mulf %28, %57 : vector<32x64xf32>
    %59 = vector.extract_strided_slice %55 {offsets = [1, 0], sizes = [1, 64], strides = [1, 1]} : vector<2x64xf32> to vector<1x64xf32>
    %60 = vector.broadcast %59 : vector<1x64xf32> to vector<32x64xf32>
    %61 = arith.addf %58, %60 : vector<32x64xf32>
    %cst_28 = arith.constant 0.000000e+00 : f32
    %62 = vector.broadcast %cst_28 : f32 to vector<32x64xf32>
    %63 = arith.maximumf %61, %62 : vector<32x64xf32>
    %c0_29 = arith.constant 0 : index
    %c0_30 = arith.constant 0 : index
    %64 = vector.load %arg6[%c0_29, %c0_30] : memref<1x64xf32, #tpu.memory_space<vmem>>, vector<1x64xf32>
    %cst_31 = arith.constant 0.000000e+00 : f32
    %65 = vector.broadcast %cst_31 : f32 to vector<32x64xf32>
    %c1_i32_32 = arith.constant 1 : i32
    %66 = tpu.dynamic_rotate %63 by %c1_i32_32 dim 0 : vector<32x64xf32>, i32 -> vector<32x64xf32>
    %67 = arith.select %4, %66, %65 : vector<32x64xi1>, vector<32x64xf32>
    %c31_i32_33 = arith.constant 31 : i32
    %68 = tpu.dynamic_rotate %63 by %c31_i32_33 dim 0 : vector<32x64xf32>, i32 -> vector<32x64xf32>
    %69 = arith.select %6, %68, %65 : vector<32x64xi1>, vector<32x64xf32>
    %70 = arith.truncf %67 : vector<32x64xf32> to vector<32x64xbf16>
    %c0_34 = arith.constant 0 : index
    %c0_35 = arith.constant 0 : index
    %c0_36 = arith.constant 0 : index
    %71 = vector.load %arg5[%c0_34, %c0_35, %c0_36] : memref<3x64x64xbf16, #tpu.memory_space<vmem>>, vector<1x64x64xbf16>
    %72 = vector.shape_cast %71 : vector<1x64x64xbf16> to vector<64x64xbf16>
    %cst_37 = arith.constant dense<0.000000e+00> : vector<32x64xf32>
    %73 = tpu.matmul %70, %72, %cst_37 {dimension_numbers = #tpu.dot_dimension_numbers<[1], [0], [0], [1], [0, 0, 1, 1], [], []>} : vector<32x64xbf16>, vector<64x64xbf16>, vector<32x64xf32> -> vector<32x64xf32>
    %74 = arith.truncf %63 : vector<32x64xf32> to vector<32x64xbf16>
    %c1_38 = arith.constant 1 : index
    %c0_39 = arith.constant 0 : index
    %c0_40 = arith.constant 0 : index
    %75 = vector.load %arg5[%c1_38, %c0_39, %c0_40] : memref<3x64x64xbf16, #tpu.memory_space<vmem>>, vector<1x64x64xbf16>
    %76 = vector.shape_cast %75 : vector<1x64x64xbf16> to vector<64x64xbf16>
    %cst_41 = arith.constant dense<0.000000e+00> : vector<32x64xf32>
    %77 = tpu.matmul %74, %76, %cst_41 {dimension_numbers = #tpu.dot_dimension_numbers<[1], [0], [0], [1], [0, 0, 1, 1], [], []>} : vector<32x64xbf16>, vector<64x64xbf16>, vector<32x64xf32> -> vector<32x64xf32>
    %78 = arith.addf %73, %77 : vector<32x64xf32>
    %79 = arith.truncf %69 : vector<32x64xf32> to vector<32x64xbf16>
    %c2_42 = arith.constant 2 : index
    %c0_43 = arith.constant 0 : index
    %c0_44 = arith.constant 0 : index
    %80 = vector.load %arg5[%c2_42, %c0_43, %c0_44] : memref<3x64x64xbf16, #tpu.memory_space<vmem>>, vector<1x64x64xbf16>
    %81 = vector.shape_cast %80 : vector<1x64x64xbf16> to vector<64x64xbf16>
    %cst_45 = arith.constant dense<0.000000e+00> : vector<32x64xf32>
    %82 = tpu.matmul %79, %81, %cst_45 {dimension_numbers = #tpu.dot_dimension_numbers<[1], [0], [0], [1], [0, 0, 1, 1], [], []>} : vector<32x64xbf16>, vector<64x64xbf16>, vector<32x64xf32> -> vector<32x64xf32>
    %83 = arith.addf %78, %82 : vector<32x64xf32>
    %84 = vector.broadcast %64 : vector<1x64xf32> to vector<32x64xf32>
    %85 = arith.addf %83, %84 : vector<32x64xf32>
    %c0_46 = arith.constant 0 : index
    %c0_47 = arith.constant 0 : index
    %86 = vector.load %arg7[%c0_46, %c0_47] : memref<1x4xf32, #tpu.memory_space<vmem>>, vector<1x4xf32>
    %c0_48 = arith.constant 0 : index
    %c0_49 = arith.constant 0 : index
    %87 = vector.load %arg8[%c0_48, %c0_49] : memref<1x4xf32, #tpu.memory_space<vmem>>, vector<1x4xf32>
    %cst_50 = arith.constant dense<0.000000e+00> : vector<64xf32>
    %88 = vector.multi_reduction <add>, %85, %cst_50 [0] : vector<32x64xf32> to vector<64xf32>
    %89 = vector.shape_cast %88 : vector<64xf32> to vector<1x64xf32>
    %90 = arith.mulf %85, %85 : vector<32x64xf32>
    %cst_51 = arith.constant dense<0.000000e+00> : vector<64xf32>
    %91 = vector.multi_reduction <add>, %90, %cst_51 [0] : vector<32x64xf32> to vector<64xf32>
    %92 = vector.shape_cast %91 : vector<64xf32> to vector<1x64xf32>
    %93 = tpu.concatenate %89, %92 in 0 : vector<1x64xf32>, vector<1x64xf32> -> vector<2x64xf32>
    %c0_52 = arith.constant 0 : index
    %c0_53 = arith.constant 0 : index
    %94 = vector.load %arg9[%c0_52, %c0_53] : memref<64x4xf32, #tpu.memory_space<vmem>>, vector<64x4xf32>
    %cst_54 = arith.constant dense<0.000000e+00> : vector<2x4xf32>
    %95 = tpu.matmul %93, %94, %cst_54 {dimension_numbers = #tpu.dot_dimension_numbers<[1], [0], [0], [1], [0, 0, 1, 1], [], []>} : vector<2x64xf32>, vector<64x4xf32>, vector<2x4xf32> -> vector<2x4xf32>
    %96 = vector.extract_strided_slice %95 {offsets = [0, 0], sizes = [1, 4], strides = [1, 1]} : vector<2x4xf32> to vector<1x4xf32>
    %cst_55 = arith.constant 0.001953125 : f32
    %97 = vector.broadcast %cst_55 : f32 to vector<1x4xf32>
    %98 = arith.mulf %96, %97 : vector<1x4xf32>
    %99 = vector.extract_strided_slice %95 {offsets = [1, 0], sizes = [1, 4], strides = [1, 1]} : vector<2x4xf32> to vector<1x4xf32>
    %cst_56 = arith.constant 0.001953125 : f32
    %100 = vector.broadcast %cst_56 : f32 to vector<1x4xf32>
    %101 = arith.mulf %99, %100 : vector<1x4xf32>
    %102 = arith.mulf %98, %98 : vector<1x4xf32>
    %103 = arith.subf %101, %102 : vector<1x4xf32>
    %cst_57 = arith.constant 9.99999974E-6 : f32
    %104 = vector.broadcast %cst_57 : f32 to vector<1x4xf32>
    %105 = arith.addf %103, %104 : vector<1x4xf32>
    %106 = math.rsqrt %105 : vector<1x4xf32>
    %107 = arith.mulf %86, %106 : vector<1x4xf32>
    %108 = arith.mulf %98, %107 : vector<1x4xf32>
    %109 = arith.subf %87, %108 : vector<1x4xf32>
    %110 = tpu.concatenate %107, %109 in 0 : vector<1x4xf32>, vector<1x4xf32> -> vector<2x4xf32>
    %c0_58 = arith.constant 0 : index
    %c0_59 = arith.constant 0 : index
    %111 = vector.load %arg10[%c0_58, %c0_59] : memref<4x64xf32, #tpu.memory_space<vmem>>, vector<4x64xf32>
    %cst_60 = arith.constant dense<0.000000e+00> : vector<2x64xf32>
    %112 = tpu.matmul %110, %111, %cst_60 {dimension_numbers = #tpu.dot_dimension_numbers<[1], [0], [0], [1], [0, 0, 1, 1], [], []>} : vector<2x4xf32>, vector<4x64xf32>, vector<2x64xf32> -> vector<2x64xf32>
    %113 = vector.extract_strided_slice %112 {offsets = [0, 0], sizes = [1, 64], strides = [1, 1]} : vector<2x64xf32> to vector<1x64xf32>
    %114 = vector.broadcast %113 : vector<1x64xf32> to vector<32x64xf32>
    %115 = arith.mulf %85, %114 : vector<32x64xf32>
    %116 = vector.extract_strided_slice %112 {offsets = [1, 0], sizes = [1, 64], strides = [1, 1]} : vector<2x64xf32> to vector<1x64xf32>
    %117 = vector.broadcast %116 : vector<1x64xf32> to vector<32x64xf32>
    %118 = arith.addf %115, %117 : vector<32x64xf32>
    %119 = arith.addf %118, %0 : vector<32x64xf32>
    %cst_61 = arith.constant 0.000000e+00 : f32
    %120 = vector.broadcast %cst_61 : f32 to vector<32x64xf32>
    %121 = arith.maximumf %119, %120 : vector<32x64xf32>
    %c0_62 = arith.constant 0 : index
    %c0_63 = arith.constant 0 : index
    %122 = vector.load %arg11[%c0_62, %c0_63] : memref<32x64xf32, #tpu.memory_space<vmem>>, vector<32x64xf32>
    tpu.vector_store %arg11[%c0_62, %c0_63], %121 {strides = array<i32>} : memref<32x64xf32, #tpu.memory_space<vmem>>, vector<32x64xf32>,
    return
  }
}

</mosaic_0001>

<llo_original>
// kernel: tile.29
$region0: #{tile.29}
  %s0 = inlined_call_operand.vmem [shape: f32[16,4,4], index: 0, kind: input, shape index: {}]
  %s1 = inlined_call_operand.vmem [shape: f32[64,4], index: 1, kind: output, shape index: {}]
  $region1: #{tile.29} parent=0
    #allocation0 [shape = 'u8[4096]{0}', space=vmem, size = 0x1000, scoped, tag = 'scoped mem for output reshape']
    %s2 = smov 3
    %v3 = vld [vmem:[%s0] ss:$16 sm:%s2]
    %s4 = smov 12
    %v5 = vld [vmem:[%s0] ss:$16 sm:%s4]
    %vm6 = vcmask 1043458
    %v7 = vsel %vm6, %v5, %v3
    %vm8 = vcmask 31744
    %9 = vst.msk [vmem:[#allocation0] sm:$0xf] %vm8, %v7
    %s10 = scalar_lea.vmem %s0, 15
    %s11 = smov 3
    %v12 = vld [vmem:[%s10] ss:$16 sm:%s11]
    %s13 = scalar_lea.vmem %s0, 15
    %s14 = smov 12
    %v15 = vld [vmem:[%s13] ss:$16 sm:%s14]
    %vm16 = vcmask 1043458
    %v17 = vsel %vm16, %v15, %v12
    %18 = vrot.lane.b32.xlu0 %v17, 60
    %v19 = vpop.permute.xlu0 %18
    %vm20 = vcmask 523744
    %21 = vst.msk [vmem:[#allocation0] sm:$0xf] %vm20, %v19
    %s22 = scalar_lea.vmem %s0, 14
    %s23 = smov 3
    %v24 = vld [vmem:[%s22] ss:$16 sm:%s23]
    %s25 = scalar_lea.vmem %s0, 14
    %s26 = smov 12
    %v27 = vld [vmem:[%s25] ss:$16 sm:%s26]
    %vm28 = vcmask 1043458
    %v29 = vsel %vm28, %v27, %v24
    %30 = vrot.lane.b32.xlu0 %v29, 56
    %v31 = vpop.permute.xlu0 %30
    %vm32 = vcmask 490944
    %33 = vst.msk [vmem:[#allocation0] sm:$0xf] %vm32, %v31
    %s34 = scalar_lea.vmem %s0, 13
    %s35 = smov 3
    %v36 = vld [vmem:[%s34] ss:$16 sm:%s35]
    %s37 = scalar_lea.vmem %s0, 13
    %s38 = smov 12
    %v39 = vld [vmem:[%s37] ss:$16 sm:%s38]
    %vm40 = vcmask 1043458
    %v41 = vsel %vm40, %v39, %v36
    %42 = vrot.lane.b32.xlu0 %v41, 52
    %v43 = vpop.permute.xlu0 %42
    %vm44 = vcmask 458144
    %45 = vst.msk [vmem:[#allocation0] sm:$0xf] %vm44, %v43
    %s46 = scalar_lea.vmem %s0, 12
    %s47 = smov 3
    %v48 = vld [vmem:[%s46] ss:$16 sm:%s47]
    %s49 = scalar_lea.vmem %s0, 12
    %s50 = smov 12
    %v51 = vld [vmem:[%s49] ss:$16 sm:%s50]
    %vm52 = vcmask 1043458
    %v53 = vsel %vm52, %v51, %v48
    %54 = vrot.lane.b32.xlu0 %v53, 48
    %v55 = vpop.permute.xlu0 %54
    %vm56 = vcmask 425344
    %57 = vst.msk [vmem:[#allocation0] sm:$0xf] %vm56, %v55
    %s58 = scalar_lea.vmem %s0, 11
    %s59 = smov 3
    %v60 = vld [vmem:[%s58] ss:$16 sm:%s59]
    %s61 = scalar_lea.vmem %s0, 11
    %s62 = smov 12
    %v63 = vld [vmem:[%s61] ss:$16 sm:%s62]
    %vm64 = vcmask 1043458
    %v65 = vsel %vm64, %v63, %v60
    %66 = vrot.lane.b32.xlu0 %v65, 44
    %v67 = vpop.permute.xlu0 %66
    %vm68 = vcmask 392544
    %69 = vst.msk [vmem:[#allocation0] sm:$0xf] %vm68, %v67
    %s70 = scalar_lea.vmem %s0, 10
    %s71 = smov 3
    %v72 = vld [vmem:[%s70] ss:$16 sm:%s71]
    %s73 = scalar_lea.vmem %s0, 10
    %s74 = smov 12
    %v75 = vld [vmem:[%s73] ss:$16 sm:%s74]
    %vm76 = vcmask 1043458
    %v77 = vsel %vm76, %v75, %v72
    %78 = vrot.lane.b32.xlu0 %v77, 40
    %v79 = vpop.permute.xlu0 %78
    %vm80 = vcmask 359744
    %81 = vst.msk [vmem:[#allocation0] sm:$0xf] %vm80, %v79
    %s82 = scalar_lea.vmem %s0, 9
    %s83 = smov 3
    %v84 = vld [vmem:[%s82] ss:$16 sm:%s83]
    %s85 = scalar_lea.vmem %s0, 9
    %s86 = smov 12
    %v87 = vld [vmem:[%s85] ss:$16 sm:%s86]
    %vm88 = vcmask 1043458
    %v89 = vsel %vm88, %v87, %v84
    %90 = vrot.lane.b32.xlu0 %v89, 36
    %v91 = vpop.permute.xlu0 %90
    %vm92 = vcmask 326944
    %93 = vst.msk [vmem:[#allocation0] sm:$0xf] %vm92, %v91
    %s94 = scalar_lea.vmem %s0, 8
    %s95 = smov 3
    %v96 = vld [vmem:[%s94] ss:$16 sm:%s95]
    %s97 = scalar_lea.vmem %s0, 8
    %s98 = smov 12
    %v99 = vld [vmem:[%s97] ss:$16 sm:%s98]
    %vm100 = vcmask 1043458
    %v101 = vsel %vm100, %v99, %v96
    %102 = vrot.lane.b32.xlu0 %v101, 32
    %v103 = vpop.permute.xlu0 %102
    %vm104 = vcmask 294144
    %105 = vst.msk [vmem:[#allocation0] sm:$0xf] %vm104, %v103
    %s106 = scalar_lea.vmem %s0, 7
    %s107 = smov 3
    %v108 = vld [vmem:[%s106] ss:$16 sm:%s107]
    %s109 = scalar_lea.vmem %s0, 7
    %s110 = smov 12
    %v111 = vld [vmem:[%s109] ss:$16 sm:%s110]
    %vm112 = vcmask 1043458
    %v113 = vsel %vm112, %v111, %v108
    %114 = vrot.lane.b32.xlu0 %v113, 28
    %v115 = vpop.permute.xlu0 %114
    %vm116 = vcmask 261344
    %117 = vst.msk [vmem:[#allocation0] sm:$0xf] %vm116, %v115
    %s118 = scalar_lea.vmem %s0, 6
    %s119 = smov 3
    %v120 = vld [vmem:[%s118] ss:$16 sm:%s119]
    %s121 = scalar_lea.vmem %s0, 6
    %s122 = smov 12
    %v123 = vld [vmem:[%s121] ss:$16 sm:%s122]
    %vm124 = vcmask 1043458
    %v125 = vsel %vm124, %v123, %v120
    %126 = vrot.lane.b32.xlu0 %v125, 24
    %v127 = vpop.permute.xlu0 %126
    %vm128 = vcmask 228544
    %129 = vst.msk [vmem:[#allocation0] sm:$0xf] %vm128, %v127
    %s130 = scalar_lea.vmem %s0, 5
    %s131 = smov 3
    %v132 = vld [vmem:[%s130] ss:$16 sm:%s131]
    %s133 = scalar_lea.vmem %s0, 5
    %s134 = smov 12
    %v135 = vld [vmem:[%s133] ss:$16 sm:%s134]
    %vm136 = vcmask 1043458
    %v137 = vsel %vm136, %v135, %v132
    %138 = vrot.lane.b32.xlu0 %v137, 20
    %v139 = vpop.permute.xlu0 %138
    %vm140 = vcmask 195744
    %141 = vst.msk [vmem:[#allocation0] sm:$0xf] %vm140, %v139
    %s142 = scalar_lea.vmem %s0, 4
    %s143 = smov 3
    %v144 = vld [vmem:[%s142] ss:$16 sm:%s143]
    %s145 = scalar_lea.vmem %s0, 4
    %s146 = smov 12
    %v147 = vld [vmem:[%s145] ss:$16 sm:%s146]
    %vm148 = vcmask 1043458
    %v149 = vsel %vm148, %v147, %v144
    %150 = vrot.lane.b32.xlu0 %v149, 16
    %v151 = vpop.permute.xlu0 %150
    %vm152 = vcmask 162944
    %153 = vst.msk [vmem:[#allocation0] sm:$0xf] %vm152, %v151
    %s154 = scalar_lea.vmem %s0, 3
    %s155 = smov 3
    %v156 = vld [vmem:[%s154] ss:$16 sm:%s155]
    %s157 = scalar_lea.vmem %s0, 3
    %s158 = smov 12
    %v159 = vld [vmem:[%s157] ss:$16 sm:%s158]
    %vm160 = vcmask 1043458
    %v161 = vsel %vm160, %v159, %v156
    %162 = vrot.lane.b32.xlu0 %v161, 12
    %v163 = vpop.permute.xlu0 %162
    %vm164 = vcmask 130144
    %165 = vst.msk [vmem:[#allocation0] sm:$0xf] %vm164, %v163
    %s166 = scalar_lea.vmem %s0, 2
    %s167 = smov 3
    %v168 = vld [vmem:[%s166] ss:$16 sm:%s167]
    %s169 = scalar_lea.vmem %s0, 2
    %s170 = smov 12
    %v171 = vld [vmem:[%s169] ss:$16 sm:%s170]
    %vm172 = vcmask 1043458
    %v173 = vsel %vm172, %v171, %v168
    %174 = vrot.lane.b32.xlu0 %v173, 8
    %v175 = vpop.permute.xlu0 %174
    %vm176 = vcmask 97344
    %177 = vst.msk [vmem:[#allocation0] sm:$0xf] %vm176, %v175
    %s178 = scalar_lea.vmem %s0, 1
    %s179 = smov 3
    %v180 = vld [vmem:[%s178] ss:$16 sm:%s179]
    %s181 = scalar_lea.vmem %s0, 1
    %s182 = smov 12
    %v183 = vld [vmem:[%s181] ss:$16 sm:%s182]
    %vm184 = vcmask 1043458
    %v185 = vsel %vm184, %v183, %v180
    %186 = vrot.lane.b32.xlu0 %v185, 4
    %v187 = vpop.permute.xlu0 %186
    %vm188 = vcmask 64544
    %189 = vst.msk [vmem:[#allocation0] sm:$0xf] %vm188, %v187
    %s191 = sshllo.u32 0, 4
    %v193 = vld [vmem:[#allocation0] sm:%s191]
    %s194 = sshllo.u32 0, 4
    %195 = vst [vmem:[%s1] sm:%s194] %v193

// kernel: tile.18
$region0: #{tile.18}
  #allocation0 [shape = 's32[1]{0}', space=sflag, size = 0x4, scoped, tag = 'scoped memory for tile.18']
  %s0 = inlined_call_operand.vmem [shape: f32[4], index: 0, kind: input, shape index: {}]
  %s1 = inlined_call_operand.vmem [shape: f32[16,4], index: 1, kind: output, shape index: {}]
  // Predicated region
  $region2: #{tile.18} parent=0 // pred_check
    _
  $region3: #{tile.18} parent=0 // pred_check_branch
    %3 = sbr.rel (0) target = $region5
  $region4: #{tile.18} parent=0 // pred_region
    _
  $region5: #{tile.18} parent=0 // pred_fallthru
    _
  %v4 = vld [vmem:[%s0] ss:$0 sm:$0xff]
  %5 = vst [vmem:[%s1] sm:$0xff] %v4
  %s6 = scalar_lea.vmem %s1, 8
  %7 = vst [vmem:[%s6] sm:$0xff] %v4

// kernel: tile.19
$region0: #{tile.19}
  %s0 = inlined_call_operand.vmem [shape: f32[16,4], index: 0, kind: input, shape index: {}]
  %s1 = inlined_call_operand.vmem [shape: f32[1,64], index: 1, kind: output, shape index: {}]
  $region1: #{tile.19} parent=0
    #allocation0 [shape = 'u8[4096]{0}', space=vmem, size = 0x1000, scoped, tag = 'scoped mem for output reshape']
    %v2 = vld [vmem:[%s0] sm:$0x1]
    %vm3 = vcmask 31744
    %4 = vst.msk [vmem:[#allocation0] sm:$0x1] %vm3, %v2
    %s5 = scalar_lea.vmem %s0, 15
    %v6 = vld [vmem:[%s5] sm:$0x1]
    %7 = vrot.lane.b32.xlu0 %v6, 60
    %v8 = vpop.permute.xlu0 %7
    %vm9 = vcmask 523744
    %10 = vst.msk [vmem:[#allocation0] sm:$0x1] %vm9, %v8
    %s11 = scalar_lea.vmem %s0, 14
    %v12 = vld [vmem:[%s11] sm:$0x1]
    %13 = vrot.lane.b32.xlu0 %v12, 56
    %v14 = vpop.permute.xlu0 %13
    %vm15 = vcmask 490944
    %16 = vst.msk [vmem:[#allocation0] sm:$0x1] %vm15, %v14
    %s17 = scalar_lea.vmem %s0, 13
    %v18 = vld [vmem:[%s17] sm:$0x1]
    %19 = vrot.lane.b32.xlu0 %v18, 52
    %v20 = vpop.permute.xlu0 %19
    %vm21 = vcmask 458144
    %22 = vst.msk [vmem:[#allocation0] sm:$0x1] %vm21, %v20
    %s23 = scalar_lea.vmem %s0, 12
    %v24 = vld [vmem:[%s23] sm:$0x1]
    %25 = vrot.lane.b32.xlu0 %v24, 48
    %v26 = vpop.permute.xlu0 %25
    %vm27 = vcmask 425344
    %28 = vst.msk [vmem:[#allocation0] sm:$0x1] %vm27, %v26
    %s29 = scalar_lea.vmem %s0, 11
    %v30 = vld [vmem:[%s29] sm:$0x1]
    %31 = vrot.lane.b32.xlu0 %v30, 44
    %v32 = vpop.permute.xlu0 %31
    %vm33 = vcmask 392544
    %34 = vst.msk [vmem:[#allocation0] sm:$0x1] %vm33, %v32
    %s35 = scalar_lea.vmem %s0, 10
    %v36 = vld [vmem:[%s35] sm:$0x1]
    %37 = vrot.lane.b32.xlu0 %v36, 40
    %v38 = vpop.permute.xlu0 %37
    %vm39 = vcmask 359744
    %40 = vst.msk [vmem:[#allocation0] sm:$0x1] %vm39, %v38
    %s41 = scalar_lea.vmem %s0, 9
    %v42 = vld [vmem:[%s41] sm:$0x1]
    %43 = vrot.lane.b32.xlu0 %v42, 36
    %v44 = vpop.permute.xlu0 %43
    %vm45 = vcmask 326944
    %46 = vst.msk [vmem:[#allocation0] sm:$0x1] %vm45, %v44
    %s47 = scalar_lea.vmem %s0, 8
    %v48 = vld [vmem:[%s47] sm:$0x1]
    %49 = vrot.lane.b32.xlu0 %v48, 32
    %v50 = vpop.permute.xlu0 %49
    %vm51 = vcmask 294144
    %52 = vst.msk [vmem:[#allocation0] sm:$0x1] %vm51, %v50
    %s53 = scalar_lea.vmem %s0, 7
    %v54 = vld [vmem:[%s53] sm:$0x1]
    %55 = vrot.lane.b32.xlu0 %v54, 28
    %v56 = vpop.permute.xlu0 %55
    %vm57 = vcmask 261344
    %58 = vst.msk [vmem:[#allocation0] sm:$0x1] %vm57, %v56
    %s59 = scalar_lea.vmem %s0, 6
    %v60 = vld [vmem:[%s59] sm:$0x1]
    %61 = vrot.lane.b32.xlu0 %v60, 24
    %v62 = vpop.permute.xlu0 %61
    %vm63 = vcmask 228544
    %64 = vst.msk [vmem:[#allocation0] sm:$0x1] %vm63, %v62
    %s65 = scalar_lea.vmem %s0, 5
    %v66 = vld [vmem:[%s65] sm:$0x1]
    %67 = vrot.lane.b32.xlu0 %v66, 20
    %v68 = vpop.permute.xlu0 %67
    %vm69 = vcmask 195744
    %70 = vst.msk [vmem:[#allocation0] sm:$0x1] %vm69, %v68
    %s71 = scalar_lea.vmem %s0, 4
    %v72 = vld [vmem:[%s71] sm:$0x1]
    %73 = vrot.lane.b32.xlu0 %v72, 16
    %v74 = vpop.permute.xlu0 %73
    %vm75 = vcmask 162944
    %76 = vst.msk [vmem:[#allocation0] sm:$0x1] %vm75, %v74
    %s77 = scalar_lea.vmem %s0, 3
    %v78 = vld [vmem:[%s77] sm:$0x1]
    %79 = vrot.lane.b32.xlu0 %v78, 12
    %v80 = vpop.permute.xlu0 %79
    %vm81 = vcmask 130144
    %82 = vst.msk [vmem:[#allocation0] sm:$0x1] %vm81, %v80
    %s83 = scalar_lea.vmem %s0, 2
    %v84 = vld [vmem:[%s83] sm:$0x1]
    %85 = vrot.lane.b32.xlu0 %v84, 8
    %v86 = vpop.permute.xlu0 %85
    %vm87 = vcmask 97344
    %88 = vst.msk [vmem:[#allocation0] sm:$0x1] %vm87, %v86
    %s89 = scalar_lea.vmem %s0, 1
    %v90 = vld [vmem:[%s89] sm:$0x1]
    %91 = vrot.lane.b32.xlu0 %v90, 4
    %v92 = vpop.permute.xlu0 %91
    %vm93 = vcmask 64544
    %94 = vst.msk [vmem:[#allocation0] sm:$0x1] %vm93, %v92
    %s96 = sshllo.u32 0, 1
    %v98 = vld [vmem:[#allocation0] sm:%s96]
    %s99 = sshllo.u32 0, 1
    %100 = vst [vmem:[%s1] sm:%s99] %v98

// kernel: residual_block.1
$region0: #{residual_block.1}
  #allocation0 [shape = 'u32[]', space=smem, size = 0x4, offset = 0x4, fixed_abs, tag = 'smem constant byte address 0x4 - core index']
  #allocation1 [shape = 'u32[144,128]{1,0:T(1,128)}', space=vmem, size = 0x12000, scoped, tag = 'internal scratch']
  %s0 = inlined_call_operand.vmem [shape: f32[32,64], index: 0, kind: input, shape index: {}]
  %s1 = inlined_call_operand.vmem [shape: bf16[3,64,64], index: 1, kind: input, shape index: {}]
  %s2 = inlined_call_operand.vmem [shape: f32[1,64], index: 2, kind: input, shape index: {}]
  %s3 = inlined_call_operand.vmem [shape: f32[1,4], index: 3, kind: input, shape index: {}]
  %s4 = inlined_call_operand.vmem [shape: f32[1,4], index: 4, kind: input, shape index: {}]
  %s5 = inlined_call_operand.vmem [shape: bf16[3,64,64], index: 5, kind: input, shape index: {}]
  %s6 = inlined_call_operand.vmem [shape: f32[1,64], index: 6, kind: input, shape index: {}]
  %s7 = inlined_call_operand.vmem [shape: f32[1,4], index: 7, kind: input, shape index: {}]
  %s8 = inlined_call_operand.vmem [shape: f32[1,4], index: 8, kind: input, shape index: {}]
  %s9 = inlined_call_operand.vmem [shape: f32[64,4], index: 9, kind: input, shape index: {}]
  %s10 = inlined_call_operand.vmem [shape: f32[4,64], index: 10, kind: input, shape index: {}]
  %s11 = inlined_call_operand.vmem [shape: f32[32,64], index: 11, kind: output, shape index: {}]
  %s12 = sld [smem:[#allocation0]]
  $region54: #{residual_block.1} parent=0
    _
  %s14 = ssub.s32 1, %s12
  %s15 = scalar_select 0, %s14, %s12
  // Predicated region
  $region2: #{residual_block.1} parent=0 // pred_check
    _
  $region3: #{residual_block.1} parent=0 // pred_check_branch
    %17 = sbr.rel (0) target = $region5
  $region4: #{residual_block.1} parent=0 // pred_region
    _
  $region5: #{residual_block.1} parent=0 // pred_fallthru
    _
  // Predicated region
  $region6: #{residual_block.1} parent=0 // pred_check
    _
  $region7: #{residual_block.1} parent=0 // pred_check_branch
    %19 = sbr.rel (0) target = $region9
  $region8: #{residual_block.1} parent=0 // pred_region
    _
  $region9: #{residual_block.1} parent=0 // pred_fallthru
    _
  // Predicated region
  $region10: #{residual_block.1} parent=0 // pred_check
    _
  $region11: #{residual_block.1} parent=0 // pred_check_branch
    %21 = sbr.rel (0) target = $region13
  $region12: #{residual_block.1} parent=0 // pred_region
    _
  $region13: #{residual_block.1} parent=0 // pred_fallthru
    _
  // Predicated region
  $region14: #{residual_block.1} parent=0 // pred_check
    _
  $region15: #{residual_block.1} parent=0 // pred_check_branch
    %23 = sbr.rel (0) target = $region17
  $region16: #{residual_block.1} parent=0 // pred_region
    _
  $region17: #{residual_block.1} parent=0 // pred_fallthru
    _
  // Predicated region
  $region18: #{residual_block.1} parent=0 // pred_check
    _
  $region19: #{residual_block.1} parent=0 // pred_check_branch
    %25 = sbr.rel (0) target = $region21
  $region20: #{residual_block.1} parent=0 // pred_region
    _
  $region21: #{residual_block.1} parent=0 // pred_fallthru
    _
  // Predicated region
  $region22: #{residual_block.1} parent=0 // pred_check
    _
  $region23: #{residual_block.1} parent=0 // pred_check_branch
    %27 = sbr.rel (0) target = $region25
  $region24: #{residual_block.1} parent=0 // pred_region
    _
  $region25: #{residual_block.1} parent=0 // pred_fallthru
    _
  // Predicated region
  $region26: #{residual_block.1} parent=0 // pred_check
    _
  $region27: #{residual_block.1} parent=0 // pred_check_branch
    %29 = sbr.rel (0) target = $region29
  $region28: #{residual_block.1} parent=0 // pred_region
    _
  $region29: #{residual_block.1} parent=0 // pred_fallthru
    _
  // Predicated region
  $region30: #{residual_block.1} parent=0 // pred_check
    _
  $region31: #{residual_block.1} parent=0 // pred_check_branch
    %31 = sbr.rel (0) target = $region33
  $region32: #{residual_block.1} parent=0 // pred_region
    _
  $region33: #{residual_block.1} parent=0 // pred_fallthru
    _
  // Predicated region
  $region34: #{residual_block.1} parent=0 // pred_check
    _
  $region35: #{residual_block.1} parent=0 // pred_check_branch
    %33 = sbr.rel (0) target = $region37
  $region36: #{residual_block.1} parent=0 // pred_region
    _
  $region37: #{residual_block.1} parent=0 // pred_fallthru
    _
  // Predicated region
  $region38: #{residual_block.1} parent=0 // pred_check
    _
  $region39: #{residual_block.1} parent=0 // pred_check_branch
    %35 = sbr.rel (0) target = $region41
  $region40: #{residual_block.1} parent=0 // pred_region
    _
  $region41: #{residual_block.1} parent=0 // pred_fallthru
    _
  // Predicated region
  $region42: #{residual_block.1} parent=0 // pred_check
    _
  $region43: #{residual_block.1} parent=0 // pred_check_branch
    %37 = sbr.rel (0) target = $region45
  $region44: #{residual_block.1} parent=0 // pred_region
    _
  $region45: #{residual_block.1} parent=0 // pred_fallthru
    _
  %v39 = vld [vmem:[%s0] sm:$0xff]
  %v40 = vld [vmem:[%s0 + $0x8] sm:$0xff]
  %v41 = vld [vmem:[%s0 + $0x10] sm:$0xff]
  %v42 = vld [vmem:[%s0 + $0x18] sm:$0xff]
  %v43 = vlaneseq
  %v44 = vshrl.u32 %v43, 7
  %v45 = vadd.s32 %v44, 8
  %vm46 = vcmp.ne.s32.totalorder %v44, 0
  %vm47 = vcmp.ne.s32.totalorder %v45, 0
  %vm48 = vcmp.ne.s32.totalorder %v44, 15
  %vm49 = vcmp.ne.s32.totalorder %v45, 15
  %v50 = vld [vmem:[%s2] sm:$0x1]
  %v51 = vrot.slane %v39, 7
  %v52 = vrot.slane %v40, 7
  %v53 = vrot.slane %v41, 7
  %v54 = vrot.slane %v42, 7
  %vm55 = vcmp.lt.s32.totalorder %v44, 1
  %v56 = vsel %vm55, %v53, %v54
  %v57 = vsel %vm55, %v52, %v53
  %v58 = vsel %vm55, %v51, %v52
  %v59 = vsel %vm55, %v54, %v51
  %v60 = vsel %vm46, %v59, 0.0
  %v61 = vsel %vm47, %v58, 0.0
  %v62 = vsel %vm46, %v57, 0.0
  %v63 = vsel %vm47, %v56, 0.0
  %v64 = vrot.slane %v39, 1
  %v65 = vrot.slane %v40, 1
  %v66 = vrot.slane %v41, 1
  %v67 = vrot.slane %v42, 1
  %vm68 = vcmp.lt.s32.totalorder %v44, 7
  %v69 = vsel %vm68, %v66, %v67
  %v70 = vsel %vm68, %v65, %v66
  %v71 = vsel %vm68, %v64, %v65
  %v72 = vsel %vm68, %v67, %v64
  %v73 = vsel %vm48, %v71, 0.0
  %v74 = vsel %vm49, %v70, 0.0
  %v75 = vsel %vm48, %v69, 0.0
  %v76 = vsel %vm49, %v72, 0.0
  %v77 = vpack.c.bf16 %v61, %v60
  %v78 = vpack.c.bf16 %v63, %v62
  %v79 = vld [vmem:[%s1] sm:$0xf]
  %v80 = vld [vmem:[%s1 + $0x4] sm:$0xf]
  %v81 = vld [vmem:[%s1 + $0x8] sm:$0xf]
  %v82 = vld [vmem:[%s1 + $0xc] sm:$0xf]
  %v83 = vld [vmem:[%s1 + $0x10] sm:$0xf]
  %v84 = vld [vmem:[%s1 + $0x14] sm:$0xf]
  %v85 = vld [vmem:[%s1 + $0x18] sm:$0xf]
  %v86 = vld [vmem:[%s1 + $0x1c] sm:$0xf]
  %v87 = vpack.c.bf16 %v40, %v39
  %v88 = vpack.c.bf16 %v42, %v41
  %s89 = scalar_lea.vmem %s1, 32
  %v90 = vld [vmem:[%s89] sm:$0xf]
  %v91 = vld [vmem:[%s89 + $0x4] sm:$0xf]
  %v92 = vld [vmem:[%s89 + $0x8] sm:$0xf]
  %v93 = vld [vmem:[%s89 + $0xc] sm:$0xf]
  %v94 = vld [vmem:[%s89 + $0x10] sm:$0xf]
  %v95 = vld [vmem:[%s89 + $0x14] sm:$0xf]
  %v96 = vld [vmem:[%s89 + $0x18] sm:$0xf]
  %v97 = vld [vmem:[%s89 + $0x1c] sm:$0xf]
  %v106 = vunpack.c.l.b16 %v90
  %v107 = vunpack.c.l.b16 %v91
  %v108 = vunpack.c.l.b16 %v92
  %v109 = vunpack.c.l.b16 %v93
  %v110 = vunpack.c.l.b16 %v94
  %v111 = vunpack.c.l.b16 %v95
  %v112 = vunpack.c.l.b16 %v96
  %v113 = vunpack.c.l.b16 %v97
  %v114 = vpack.c.b16 %v107, %v106
  %v115 = vpack.c.b16 %v109, %v108
  %v116 = vpack.c.b16 %v111, %v110
  %v117 = vpack.c.b16 %v113, %v112
  %vm122 = vcmask 523264
  %v124 = vsel %vm122, %v87, 0
  %v127 = vsel %vm122, %v88, 0
  %129 = vmatprep.subr.bf16.mxu0 0
  %130 = vmatpush1.bf16.msra.mxu0 %v114
  %131 = vmatprep.subr.bf16.mxu0 0
  %132 = vmatpush1.bf16.msra.mxu0 %v115
  %133 = vmatprep.subr.bf16.mxu0 0
  %134 = vmatpush1.bf16.msra.mxu0 %v116
  %135 = vmatprep.subr.bf16.mxu0 0
  %136 = vmatpush1.bf16.msra.mxu0 %v117
  %137 = vmatprep.subr.bf16.mxu0 0
  %138 = vmatpush1.bf16.msra.mxu0 0
  %139 = vmatprep.subr.bf16.mxu0 0
  %140 = vmatpush1.bf16.msra.mxu0 0
  %141 = vmatprep.subr.bf16.mxu0 0
  %142 = vmatpush1.bf16.msra.mxu0 0
  %143 = vmatprep.subr.bf16.mxu0 0
  %144 = vmatpush1.bf16.msra.mxu0 0
  %145 = vmatprep.subr.bf16.mxu0 0
  %146 = vmatpush1.bf16.msra.mxu0 0
  %147 = vmatprep.subr.bf16.mxu0 0
  %148 = vmatpush1.bf16.msra.mxu0 0
  %149 = vmatprep.subr.bf16.mxu0 0
  %150 = vmatpush1.bf16.msra.mxu0 0
  %151 = vmatprep.subr.bf16.mxu0 0
  %152 = vmatpush1.bf16.msra.mxu0 0
  %153 = vmatprep.subr.bf16.mxu0 0
  %154 = vmatpush1.bf16.msra.mxu0 0
  %155 = vmatprep.subr.bf16.mxu0 0
  %156 = vmatpush1.bf16.msra.mxu0 0
  %157 = vmatprep.subr.bf16.mxu0 0
  %158 = vmatpush1.bf16.msra.mxu0 0
  %159 = vmatprep.subr.bf16.mxu0 0
  %160 = vmatpush1.bf16.msra.mxu0 0
  %161 = vmatprep.mubr.bf16.mxu0 0
  %162 = vmatmul.mubr.bf16.gmra.mrb[0].mxu0 %v124
  %v163 = vpop.f32.mrb[0].mxu0
  %v164 = vadd.f32 0.0, %v163
  %v165 = vpop.f32.mrb[0].mxu0
  %v166 = vpop.f32.mrb[0].mxu0
  %v167 = vadd.f32 0.0, %v166
  %v168 = vpop.f32.mrb[0].mxu0
  %169 = vmatprep.mubr.bf16.mxu0 0
  %170 = vmatmul.mubr.bf16.gmra.mrb[0].mxu0 %v127
  %v171 = vpop.f32.mrb[0].mxu0
  %v172 = vadd.f32 0.0, %v171
  %v173 = vpop.f32.mrb[0].mxu0
  %v174 = vpop.f32.mrb[0].mxu0
  %v175 = vadd.f32 0.0, %v174
  %v176 = vpop.f32.mrb[0].mxu0
  %177 = vdwg.mxu0
  %v186 = vunpack.c.l.b16 %v79
  %v187 = vunpack.c.l.b16 %v80
  %v188 = vunpack.c.l.b16 %v81
  %v189 = vunpack.c.l.b16 %v82
  %v190 = vunpack.c.l.b16 %v83
  %v191 = vunpack.c.l.b16 %v84
  %v192 = vunpack.c.l.b16 %v85
  %v193 = vunpack.c.l.b16 %v86
  %v194 = vpack.c.b16 %v187, %v186
  %v195 = vpack.c.b16 %v189, %v188
  %v196 = vpack.c.b16 %v191, %v190
  %v197 = vpack.c.b16 %v193, %v192
  %v203 = vsel %vm122, %v77, 0
  %v206 = vsel %vm122, %v78, 0
  %208 = vmatprep.subr.bf16.mxu0 0
  %209 = vmatpush1.bf16.msra.mxu0 %v194
  %210 = vmatprep.subr.bf16.mxu0 0
  %211 = vmatpush1.bf16.msra.mxu0 %v195
  %212 = vmatprep.subr.bf16.mxu0 0
  %213 = vmatpush1.bf16.msra.mxu0 %v196
  %214 = vmatprep.subr.bf16.mxu0 0
  %215 = vmatpush1.bf16.msra.mxu0 %v197
  %216 = vmatprep.subr.bf16.mxu0 0
  %217 = vmatpush1.bf16.msra.mxu0 0
  %218 = vmatprep.subr.bf16.mxu0 0
  %219 = vmatpush1.bf16.msra.mxu0 0
  %220 = vmatprep.subr.bf16.mxu0 0
  %221 = vmatpush1.bf16.msra.mxu0 0
  %222 = vmatprep.subr.bf16.mxu0 0
  %223 = vmatpush1.bf16.msra.mxu0 0
  %224 = vmatprep.subr.bf16.mxu0 0
  %225 = vmatpush1.bf16.msra.mxu0 0
  %226 = vmatprep.subr.bf16.mxu0 0
  %227 = vmatpush1.bf16.msra.mxu0 0
  %228 = vmatprep.subr.bf16.mxu0 0
  %229 = vmatpush1.bf16.msra.mxu0 0
  %230 = vmatprep.subr.bf16.mxu0 0
  %231 = vmatpush1.bf16.msra.mxu0 0
  %232 = vmatprep.subr.bf16.mxu0 0
  %233 = vmatpush1.bf16.msra.mxu0 0
  %234 = vmatprep.subr.bf16.mxu0 0
  %235 = vmatpush1.bf16.msra.mxu0 0
  %236 = vmatprep.subr.bf16.mxu0 0
  %237 = vmatpush1.bf16.msra.mxu0 0
  %238 = vmatprep.subr.bf16.mxu0 0
  %239 = vmatpush1.bf16.msra.mxu0 0
  %240 = vmatprep.mubr.bf16.mxu0 0
  %241 = vmatmul.mubr.bf16.gmra.mrb[0].mxu0 %v203
  %v242 = vpop.f32.mrb[0].mxu0
  %v243 = vadd.f32 %v164, %v242
  %v244 = vpop.f32.mrb[0].mxu0
  %v245 = vpop.f32.mrb[0].mxu0
  %v246 = vadd.f32 %v167, %v245
  %v247 = vpop.f32.mrb[0].mxu0
  %248 = vmatprep.mubr.bf16.mxu0 0
  %249 = vmatmul.mubr.bf16.gmra.mrb[0].mxu0 %v206
  %v250 = vpop.f32.mrb[0].mxu0
  %v251 = vadd.f32 %v172, %v250
  %v252 = vpop.f32.mrb[0].mxu0
  %v253 = vpop.f32.mrb[0].mxu0
  %v254 = vadd.f32 %v175, %v253
  %v255 = vpop.f32.mrb[0].mxu0
  %256 = vdwg.mxu0
  %v257 = vpack.c.bf16 %v74, %v73
  %v258 = vpack.c.bf16 %v76, %v75
  %s259 = scalar_lea.vmem %s1, 64
  %v260 = vld [vmem:[%s259] sm:$0xf]
  %v261 = vld [vmem:[%s259 + $0x4] sm:$0xf]
  %v262 = vld [vmem:[%s259 + $0x8] sm:$0xf]
  %v263 = vld [vmem:[%s259 + $0xc] sm:$0xf]
  %v264 = vld [vmem:[%s259 + $0x10] sm:$0xf]
  %v265 = vld [vmem:[%s259 + $0x14] sm:$0xf]
  %v266 = vld [vmem:[%s259 + $0x18] sm:$0xf]
  %v267 = vld [vmem:[%s259 + $0x1c] sm:$0xf]
  %v276 = vunpack.c.l.b16 %v260
  %v277 = vunpack.c.l.b16 %v261
  %v278 = vunpack.c.l.b16 %v262
  %v279 = vunpack.c.l.b16 %v263
  %v280 = vunpack.c.l.b16 %v264
  %v281 = vunpack.c.l.b16 %v265
  %v282 = vunpack.c.l.b16 %v266
  %v283 = vunpack.c.l.b16 %v267
  %v284 = vpack.c.b16 %v277, %v276
  %v285 = vpack.c.b16 %v279, %v278
  %v286 = vpack.c.b16 %v281, %v280
  %v287 = vpack.c.b16 %v283, %v282
  %v293 = vsel %vm122, %v257, 0
  %v296 = vsel %vm122, %v258, 0
  %298 = vmatprep.subr.bf16.mxu0 0
  %299 = vmatpush1.bf16.msra.mxu0 %v284
  %300 = vmatprep.subr.bf16.mxu0 0
  %301 = vmatpush1.bf16.msra.mxu0 %v285
  %302 = vmatprep.subr.bf16.mxu0 0
  %303 = vmatpush1.bf16.msra.mxu0 %v286
  %304 = vmatprep.subr.bf16.mxu0 0
  %305 = vmatpush1.bf16.msra.mxu0 %v287
  %306 = vmatprep.subr.bf16.mxu0 0
  %307 = vmatpush1.bf16.msra.mxu0 0
  %308 = vmatprep.subr.bf16.mxu0 0
  %309 = vmatpush1.bf16.msra.mxu0 0
  %310 = vmatprep.subr.bf16.mxu0 0
  %311 = vmatpush1.bf16.msra.mxu0 0
  %312 = vmatprep.subr.bf16.mxu0 0
  %313 = vmatpush1.bf16.msra.mxu0 0
  %314 = vmatprep.subr.bf16.mxu0 0
  %315 = vmatpush1.bf16.msra.mxu0 0
  %316 = vmatprep.subr.bf16.mxu0 0
  %317 = vmatpush1.bf16.msra.mxu0 0
  %318 = vmatprep.subr.bf16.mxu0 0
  %319 = vmatpush1.bf16.msra.mxu0 0
  %320 = vmatprep.subr.bf16.mxu0 0
  %321 = vmatpush1.bf16.msra.mxu0 0
  %322 = vmatprep.subr.bf16.mxu0 0
  %323 = vmatpush1.bf16.msra.mxu0 0
  %324 = vmatprep.subr.bf16.mxu0 0
  %325 = vmatpush1.bf16.msra.mxu0 0
  %326 = vmatprep.subr.bf16.mxu0 0
  %327 = vmatpush1.bf16.msra.mxu0 0
  %328 = vmatprep.subr.bf16.mxu0 0
  %329 = vmatpush1.bf16.msra.mxu0 0
  %330 = vmatprep.mubr.bf16.mxu0 0
  %331 = vmatmul.mubr.bf16.gmra.mrb[0].mxu0 %v293
  %v332 = vpop.f32.mrb[0].mxu0
  %v333 = vadd.f32 0.0, %v332
  %v334 = vpop.f32.mrb[0].mxu0
  %v335 = vpop.f32.mrb[0].mxu0
  %v336 = vadd.f32 0.0, %v335
  %v337 = vpop.f32.mrb[0].mxu0
  %338 = vmatprep.mubr.bf16.mxu0 0
  %339 = vmatmul.mubr.bf16.gmra.mrb[0].mxu0 %v296
  %v340 = vpop.f32.mrb[0].mxu0
  %v341 = vadd.f32 0.0, %v340
  %v342 = vpop.f32.mrb[0].mxu0
  %v343 = vpop.f32.mrb[0].mxu0
  %v344 = vadd.f32 0.0, %v343
  %v345 = vpop.f32.mrb[0].mxu0
  %346 = vdwg.mxu0
  %v347 = vadd.f32 %v243, %v333
  %v348 = vadd.f32 %v246, %v336
  %v349 = vadd.f32 %v251, %v341
  %v350 = vadd.f32 %v254, %v344
  %v352 = vlaneseq
  %v353 = vshrl.u32 %v352, 7
  %v354 = vsub.s32 0, %v353
  %v355 = vrot.slane %v50, %v354
  %v357 = vadd.f32 %v347, %v355
  %v358 = vadd.f32 %v348, %v355
  %v359 = vadd.f32 %v349, %v355
  %v360 = vadd.f32 %v350, %v355
  %v361 = vld [vmem:[%s3] sm:$0x1]
  %v362 = vld [vmem:[%s4] sm:$0x1]
  %v363 = vsel %vm122, %v357, 0.0
  %v364 = vsel %vm122, %v358, 0.0
  %v365 = vadd.f32 %v363, %v364
  %v366 = vsel %vm122, %v359, 0.0
  %v367 = vadd.f32 %v365, %v366
  %v368 = vsel %vm122, %v360, 0.0
  %v369 = vadd.f32 %v367, %v368
  %v370 = vrot.slane %v369, 4
  %v371 = vadd.f32 %v369, %v370
  %v372 = vrot.slane %v371, 2
  %v373 = vadd.f32 %v371, %v372
  %v374 = vrot.slane %v373, 1
  %v375 = vadd.f32 %v373, %v374
  %v376 = vmul.f32 %v357, %v357
  %v377 = vmul.f32 %v358, %v358
  %v378 = vmul.f32 %v359, %v359
  %v379 = vmul.f32 %v360, %v360
  %v380 = vsel %vm122, %v376, 0.0
  %v381 = vsel %vm122, %v377, 0.0
  %v382 = vadd.f32 %v380, %v381
  %v383 = vsel %vm122, %v378, 0.0
  %v384 = vadd.f32 %v382, %v383
  %v385 = vsel %vm122, %v379, 0.0
  %v386 = vadd.f32 %v384, %v385
  %v387 = vrot.slane %v386, 4
  %v388 = vadd.f32 %v386, %v387
  %v389 = vrot.slane %v388, 2
  %v390 = vadd.f32 %v388, %v389
  %v391 = vrot.slane %v390, 1
  %v392 = vadd.f32 %v390, %v391
  %vm393 = vcmask 1040384
  %v394 = vsel %vm393, %v375, %v392
  %v395 = vld [vmem:[%s9] sm:$0xff]
  %v396 = vld [vmem:[%s9 + $0x8] sm:$0xff]
  %v397 = vld [vmem:[%s9 + $0x10] sm:$0xff]
  %v398 = vld [vmem:[%s9 + $0x18] sm:$0xff]
  %v399 = vld [vmem:[%s9 + $0x20] sm:$0xff]
  %v400 = vld [vmem:[%s9 + $0x28] sm:$0xff]
  %v401 = vld [vmem:[%s9 + $0x30] sm:$0xff]
  %v402 = vld [vmem:[%s9 + $0x38] sm:$0xff]
  %v404 = vsel %vm122, %v394, 0
  %406 = vmatprep.subr.mxu0 0.0
  %407 = vmatpush1.msra.mxu0 %v395
  %408 = vmatprep.subr.mxu0 0.0
  %409 = vmatpush1.msra.mxu0 %v396
  %410 = vmatprep.subr.mxu0 0.0
  %411 = vmatpush1.msra.mxu0 %v397
  %412 = vmatprep.subr.mxu0 0.0
  %413 = vmatpush1.msra.mxu0 %v398
  %414 = vmatprep.subr.mxu0 0.0
  %415 = vmatpush1.msra.mxu0 %v399
  %416 = vmatprep.subr.mxu0 0.0
  %417 = vmatpush1.msra.mxu0 %v400
  %418 = vmatprep.subr.mxu0 0.0
  %419 = vmatpush1.msra.mxu0 %v401
  %420 = vmatprep.subr.mxu0 0.0
  %421 = vmatpush1.msra.mxu0 %v402
  %422 = vmatprep.subr.mxu0 0.0
  %423 = vmatpush1.msra.mxu0 0.0
  %424 = vmatprep.subr.mxu0 0.0
  %425 = vmatpush1.msra.mxu0 0.0
  %426 = vmatprep.subr.mxu0 0.0
  %427 = vmatpush1.msra.mxu0 0.0
  %428 = vmatprep.subr.mxu0 0.0
  %429 = vmatpush1.msra.mxu0 0.0
  %430 = vmatprep.subr.mxu0 0.0
  %431 = vmatpush1.msra.mxu0 0.0
  %432 = vmatprep.subr.mxu0 0.0
  %433 = vmatpush1.msra.mxu0 0.0
  %434 = vmatprep.subr.mxu0 0.0
  %435 = vmatpush1.msra.mxu0 0.0
  %436 = vmatprep.subr.mxu0 0.0
  %437 = vmatpush1.msra.mxu0 0.0
  %438 = vmatprep.subr.mxu0 0.0
  %439 = vmatpush1.msra.mxu0 0.0
  %440 = vmatprep.subr.mxu0 0.0
  %441 = vmatpush1.msra.mxu0 0.0
  %442 = vmatprep.subr.mxu0 0.0
  %443 = vmatpush1.msra.mxu0 0.0
  %444 = vmatprep.subr.mxu0 0.0
  %445 = vmatpush1.msra.mxu0 0.0
  %446 = vmatprep.subr.mxu0 0.0
  %447 = vmatpush1.msra.mxu0 0.0
  %448 = vmatprep.subr.mxu0 0.0
  %449 = vmatpush1.msra.mxu0 0.0
  %450 = vmatprep.subr.mxu0 0.0
  %451 = vmatpush1.msra.mxu0 0.0
  %452 = vmatprep.subr.mxu0 0.0
  %453 = vmatpush1.msra.mxu0 0.0
  %454 = vmatprep.subr.mxu0 0.0
  %455 = vmatpush1.msra.mxu0 0.0
  %456 = vmatprep.subr.mxu0 0.0
  %457 = vmatpush1.msra.mxu0 0.0
  %458 = vmatprep.subr.mxu0 0.0
  %459 = vmatpush1.msra.mxu0 0.0
  %460 = vmatprep.subr.mxu0 0.0
  %461 = vmatpush1.msra.mxu0 0.0
  %462 = vmatprep.subr.mxu0 0.0
  %463 = vmatpush1.msra.mxu0 0.0
  %464 = vmatprep.subr.mxu0 0.0
  %465 = vmatpush1.msra.mxu0 0.0
  %466 = vmatprep.subr.mxu0 0.0
  %467 = vmatpush1.msra.mxu0 0.0
  %468 = vmatprep.subr.mxu0 0.0
  %469 = vmatpush1.msra.mxu0 0.0
  %470 = vmatprep.mubr.f32.mxu0 0.0
  %471 = vmatmul.mubr.f32.gmra.mrb[0].mxu0 %v404
  %v472 = vpop.f32.mrb[0].mxu0
  %v473 = vadd.f32 0.0, %v472
  %v474 = vpop.f32.mrb[0].mxu0
  %475 = vdwg.mxu0
  %v476 = vmul.f32 %v473, 0.001953125
  %v477 = vmul.f32 %v476, %v476
  %v479 = vrot.slane %v477, 7
  %v481 = vsub.f32 %v476, %v479
  %v482 = vadd.f32 %v481, 1e-05
  %v483 = vrsqrt.pop %v482
  %v486 = vunpack.c.l.s4 1966171168
  %v487 = vunpack.c.0.s8 %v486
  %v488 = vlaneseq
  %v489 = vshrl.u32 %v488, 7
  %v490 = vsub.s32 %v487, %v489
  %v491 = vrot.slane %v483, %v490
  %v492 = vcombine.high %v491, %v491
  %v494 = vunpack.c.l.s4 1966171168
  %v495 = vunpack.c.0.s8 %v494
  %v496 = vlaneseq
  %v497 = vshrl.u32 %v496, 7
  %v498 = vsub.s32 %v495, %v497
  %v499 = vrot.slane %v492, %v498
  %v501 = vmul.f32 %v361, %v499
  %v502 = vmul.f32 %v476, %v501
  %v503 = vsub.f32 %v362, %v502
  %v505 = vlaneseq
  %v506 = vshrl.u32 %v505, 7
  %v507 = vsub.s32 0, %v506
  %v508 = vrot.slane %v503, %v507
  %v510 = vsel %vm393, %v501, %v508
  %v511 = vld [vmem:[%s10] sm:$0xf]
  %vm512 = vcmask 31744
  %v514 = vsel %vm512, %v510, 0
  %vm516 = vcmask 1043456
  %v518 = vsel %vm516, %v511, 0
  %520 = vmatprep.subr.mxu0 0.0
  %521 = vmatpush1.msra.mxu0 %v518
  %522 = vmatprep.subr.mxu0 0.0
  %523 = vmatpush1.msra.mxu0 0.0
  %524 = vmatprep.subr.mxu0 0.0
  %525 = vmatpush1.msra.mxu0 0.0
  %526 = vmatprep.subr.mxu0 0.0
  %527 = vmatpush1.msra.mxu0 0.0
  %528 = vmatprep.subr.mxu0 0.0
  %529 = vmatpush1.msra.mxu0 0.0
  %530 = vmatprep.subr.mxu0 0.0
  %531 = vmatpush1.msra.mxu0 0.0
  %532 = vmatprep.subr.mxu0 0.0
  %533 = vmatpush1.msra.mxu0 0.0
  %534 = vmatprep.subr.mxu0 0.0
  %535 = vmatpush1.msra.mxu0 0.0
  %536 = vmatprep.subr.mxu0 0.0
  %537 = vmatpush1.msra.mxu0 0.0
  %538 = vmatprep.subr.mxu0 0.0
  %539 = vmatpush1.msra.mxu0 0.0
  %540 = vmatprep.subr.mxu0 0.0
  %541 = vmatpush1.msra.mxu0 0.0
  %542 = vmatprep.subr.mxu0 0.0
  %543 = vmatpush1.msra.mxu0 0.0
  %544 = vmatprep.subr.mxu0 0.0
  %545 = vmatpush1.msra.mxu0 0.0
  %546 = vmatprep.subr.mxu0 0.0
  %547 = vmatpush1.msra.mxu0 0.0
  %548 = vmatprep.subr.mxu0 0.0
  %549 = vmatpush1.msra.mxu0 0.0
  %550 = vmatprep.subr.mxu0 0.0
  %551 = vmatpush1.msra.mxu0 0.0
  %552 = vmatprep.subr.mxu0 0.0
  %553 = vmatpush1.msra.mxu0 0.0
  %554 = vmatprep.subr.mxu0 0.0
  %555 = vmatpush1.msra.mxu0 0.0
  %556 = vmatprep.subr.mxu0 0.0
  %557 = vmatpush1.msra.mxu0 0.0
  %558 = vmatprep.subr.mxu0 0.0
  %559 = vmatpush1.msra.mxu0 0.0
  %560 = vmatprep.subr.mxu0 0.0
  %561 = vmatpush1.msra.mxu0 0.0
  %562 = vmatprep.subr.mxu0 0.0
  %563 = vmatpush1.msra.mxu0 0.0
  %564 = vmatprep.subr.mxu0 0.0
  %565 = vmatpush1.msra.mxu0 0.0
  %566 = vmatprep.subr.mxu0 0.0
  %567 = vmatpush1.msra.mxu0 0.0
  %568 = vmatprep.subr.mxu0 0.0
  %569 = vmatpush1.msra.mxu0 0.0
  %570 = vmatprep.subr.mxu0 0.0
  %571 = vmatpush1.msra.mxu0 0.0
  %572 = vmatprep.subr.mxu0 0.0
  %573 = vmatpush1.msra.mxu0 0.0
  %574 = vmatprep.subr.mxu0 0.0
  %575 = vmatpush1.msra.mxu0 0.0
  %576 = vmatprep.subr.mxu0 0.0
  %577 = vmatpush1.msra.mxu0 0.0
  %578 = vmatprep.subr.mxu0 0.0
  %579 = vmatpush1.msra.mxu0 0.0
  %580 = vmatprep.subr.mxu0 0.0
  %581 = vmatpush1.msra.mxu0 0.0
  %582 = vmatprep.subr.mxu0 0.0
  %583 = vmatpush1.msra.mxu0 0.0
  %584 = vmatprep.mubr.f32.mxu0 0.0
  %585 = vmatmul.mubr.f32.gmra.mrb[0].mxu0 %v514
  %v586 = vpop.f32.mrb[0].mxu0
  %v587 = vadd.f32 0.0, %v586
  %v588 = vpop.f32.mrb[0].mxu0
  %589 = vdwg.mxu0
  %v590 = vlaneseq
  %v591 = vshrl.u32 %v590, 7
  %v592 = vsub.s32 0, %v591
  %v593 = vrot.slane %v587, %v592
  %v594 = vmul.f32 %v357, %v593
  %v595 = vmul.f32 %v358, %v593
  %v596 = vmul.f32 %v359, %v593
  %v597 = vmul.f32 %v360, %v593
  %v598 = vlaneseq
  %v599 = vshrl.u32 %v598, 7
  %v600 = vsub.s32 1, %v599
  %v601 = vrot.slane %v587, %v600
  %v602 = vadd.f32 %v594, %v601
  %v603 = vadd.f32 %v595, %v601
  %v604 = vadd.f32 %v596, %v601
  %v605 = vadd.f32 %v597, %v601
  %v606 = vmax.f32 %v602, 0.0
  %v607 = vmax.f32 %v603, 0.0
  %v608 = vmax.f32 %v604, 0.0
  %v609 = vmax.f32 %v605, 0.0
  %v610 = vld [vmem:[%s6] sm:$0x1]
  %v611 = vrot.slane %v606, 7
  %v612 = vrot.slane %v607, 7
  %v613 = vrot.slane %v608, 7
  %v614 = vrot.slane %v609, 7
  %v615 = vsel %vm55, %v613, %v614
  %v616 = vsel %vm55, %v612, %v613
  %v617 = vsel %vm55, %v611, %v612
  %v618 = vsel %vm55, %v614, %v611
  %v619 = vsel %vm46, %v618, 0.0
  %v620 = vsel %vm47, %v617, 0.0
  %v621 = vsel %vm46, %v616, 0.0
  %v622 = vsel %vm47, %v615, 0.0
  %v623 = vrot.slane %v606, 1
  %v624 = vrot.slane %v607, 1
  %v625 = vrot.slane %v608, 1
  %v626 = vrot.slane %v609, 1
  %v627 = vsel %vm68, %v625, %v626
  %v628 = vsel %vm68, %v624, %v625
  %v629 = vsel %vm68, %v623, %v624
  %v630 = vsel %vm68, %v626, %v623
  %v631 = vsel %vm48, %v629, 0.0
  %v632 = vsel %vm49, %v628, 0.0
  %v633 = vsel %vm48, %v627, 0.0
  %v634 = vsel %vm49, %v630, 0.0
  %v635 = vpack.c.bf16 %v620, %v619
  %v636 = vpack.c.bf16 %v622, %v621
  %v637 = vld [vmem:[%s5] sm:$0xf]
  %v638 = vld [vmem:[%s5 + $0x4] sm:$0xf]
  %v639 = vld [vmem:[%s5 + $0x8] sm:$0xf]
  %v640 = vld [vmem:[%s5 + $0xc] sm:$0xf]
  %v641 = vld [vmem:[%s5 + $0x10] sm:$0xf]
  %v642 = vld [vmem:[%s5 + $0x14] sm:$0xf]
  %v643 = vld [vmem:[%s5 + $0x18] sm:$0xf]
  %v644 = vld [vmem:[%s5 + $0x1c] sm:$0xf]
  %v645 = vpack.c.bf16 %v607, %v606
  %v646 = vpack.c.bf16 %v609, %v608
  %s647 = scalar_lea.vmem %s5, 32
  %v648 = vld [vmem:[%s647] sm:$0xf]
  %v649 = vld [vmem:[%s647 + $0x4] sm:$0xf]
  %v650 = vld [vmem:[%s647 + $0x8] sm:$0xf]
  %v651 = vld [vmem:[%s647 + $0xc] sm:$0xf]
  %v652 = vld [vmem:[%s647 + $0x10] sm:$0xf]
  %v653 = vld [vmem:[%s647 + $0x14] sm:$0xf]
  %v654 = vld [vmem:[%s647 + $0x18] sm:$0xf]
  %v655 = vld [vmem:[%s647 + $0x1c] sm:$0xf]
  %v664 = vunpack.c.l.b16 %v648
  %v665 = vunpack.c.l.b16 %v649
  %v666 = vunpack.c.l.b16 %v650
  %v667 = vunpack.c.l.b16 %v651
  %v668 = vunpack.c.l.b16 %v652
  %v669 = vunpack.c.l.b16 %v653
  %v670 = vunpack.c.l.b16 %v654
  %v671 = vunpack.c.l.b16 %v655
  %v672 = vpack.c.b16 %v665, %v664
  %v673 = vpack.c.b16 %v667, %v666
  %v674 = vpack.c.b16 %v669, %v668
  %v675 = vpack.c.b16 %v671, %v670
  %v681 = vsel %vm122, %v645, 0
  %v684 = vsel %vm122, %v646, 0
  %686 = vmatprep.subr.bf16.mxu0 0
  %687 = vmatpush1.bf16.msra.mxu0 %v672
  %688 = vmatprep.subr.bf16.mxu0 0
  %689 = vmatpush1.bf16.msra.mxu0 %v673
  %690 = vmatprep.subr.bf16.mxu0 0
  %691 = vmatpush1.bf16.msra.mxu0 %v674
  %692 = vmatprep.subr.bf16.mxu0 0
  %693 = vmatpush1.bf16.msra.mxu0 %v675
  %694 = vmatprep.subr.bf16.mxu0 0
  %695 = vmatpush1.bf16.msra.mxu0 0
  %696 = vmatprep.subr.bf16.mxu0 0
  %697 = vmatpush1.bf16.msra.mxu0 0
  %698 = vmatprep.subr.bf16.mxu0 0
  %699 = vmatpush1.bf16.msra.mxu0 0
  %700 = vmatprep.subr.bf16.mxu0 0
  %701 = vmatpush1.bf16.msra.mxu0 0
  %702 = vmatprep.subr.bf16.mxu0 0
  %703 = vmatpush1.bf16.msra.mxu0 0
  %704 = vmatprep.subr.bf16.mxu0 0
  %705 = vmatpush1.bf16.msra.mxu0 0
  %706 = vmatprep.subr.bf16.mxu0 0
  %707 = vmatpush1.bf16.msra.mxu0 0
  %708 = vmatprep.subr.bf16.mxu0 0
  %709 = vmatpush1.bf16.msra.mxu0 0
  %710 = vmatprep.subr.bf16.mxu0 0
  %711 = vmatpush1.bf16.msra.mxu0 0
  %712 = vmatprep.subr.bf16.mxu0 0
  %713 = vmatpush1.bf16.msra.mxu0 0
  %714 = vmatprep.subr.bf16.mxu0 0
  %715 = vmatpush1.bf16.msra.mxu0 0
  %716 = vmatprep.subr.bf16.mxu0 0
  %717 = vmatpush1.bf16.msra.mxu0 0
  %718 = vmatprep.mubr.bf16.mxu0 0
  %719 = vmatmul.mubr.bf16.gmra.mrb[0].mxu0 %v681
  %v720 = vpop.f32.mrb[0].mxu0
  %v721 = vadd.f32 0.0, %v720
  %v722 = vpop.f32.mrb[0].mxu0
  %v723 = vpop.f32.mrb[0].mxu0
  %v724 = vadd.f32 0.0, %v723
  %v725 = vpop.f32.mrb[0].mxu0
  %726 = vmatprep.mubr.bf16.mxu0 0
  %727 = vmatmul.mubr.bf16.gmra.mrb[0].mxu0 %v684
  %v728 = vpop.f32.mrb[0].mxu0
  %v729 = vadd.f32 0.0, %v728
  %v730 = vpop.f32.mrb[0].mxu0
  %v731 = vpop.f32.mrb[0].mxu0
  %v732 = vadd.f32 0.0, %v731
  %v733 = vpop.f32.mrb[0].mxu0
  %734 = vdwg.mxu0
  %v743 = vunpack.c.l.b16 %v637
  %v744 = vunpack.c.l.b16 %v638
  %v745 = vunpack.c.l.b16 %v639
  %v746 = vunpack.c.l.b16 %v640
  %v747 = vunpack.c.l.b16 %v641
  %v748 = vunpack.c.l.b16 %v642
  %v749 = vunpack.c.l.b16 %v643
  %v750 = vunpack.c.l.b16 %v644
  %v751 = vpack.c.b16 %v744, %v743
  %v752 = vpack.c.b16 %v746, %v745
  %v753 = vpack.c.b16 %v748, %v747
  %v754 = vpack.c.b16 %v750, %v749
  %v760 = vsel %vm122, %v635, 0
  %v763 = vsel %vm122, %v636, 0
  %765 = vmatprep.subr.bf16.mxu0 0
  %766 = vmatpush1.bf16.msra.mxu0 %v751
  %767 = vmatprep.subr.bf16.mxu0 0
  %768 = vmatpush1.bf16.msra.mxu0 %v752
  %769 = vmatprep.subr.bf16.mxu0 0
  %770 = vmatpush1.bf16.msra.mxu0 %v753
  %771 = vmatprep.subr.bf16.mxu0 0
  %772 = vmatpush1.bf16.msra.mxu0 %v754
  %773 = vmatprep.subr.bf16.mxu0 0
  %774 = vmatpush1.bf16.msra.mxu0 0
  %775 = vmatprep.subr.bf16.mxu0 0
  %776 = vmatpush1.bf16.msra.mxu0 0
  %777 = vmatprep.subr.bf16.mxu0 0
  %778 = vmatpush1.bf16.msra.mxu0 0
  %779 = vmatprep.subr.bf16.mxu0 0
  %780 = vmatpush1.bf16.msra.mxu0 0
  %781 = vmatprep.subr.bf16.mxu0 0
  %782 = vmatpush1.bf16.msra.mxu0 0
  %783 = vmatprep.subr.bf16.mxu0 0
  %784 = vmatpush1.bf16.msra.mxu0 0
  %785 = vmatprep.subr.bf16.mxu0 0
  %786 = vmatpush1.bf16.msra.mxu0 0
  %787 = vmatprep.subr.bf16.mxu0 0
  %788 = vmatpush1.bf16.msra.mxu0 0
  %789 = vmatprep.subr.bf16.mxu0 0
  %790 = vmatpush1.bf16.msra.mxu0 0
  %791 = vmatprep.subr.bf16.mxu0 0
  %792 = vmatpush1.bf16.msra.mxu0 0
  %793 = vmatprep.subr.bf16.mxu0 0
  %794 = vmatpush1.bf16.msra.mxu0 0
  %795 = vmatprep.subr.bf16.mxu0 0
  %796 = vmatpush1.bf16.msra.mxu0 0
  %797 = vmatprep.mubr.bf16.mxu0 0
  %798 = vmatmul.mubr.bf16.gmra.mrb[0].mxu0 %v760
  %v799 = vpop.f32.mrb[0].mxu0
  %v800 = vadd.f32 %v721, %v799
  %v801 = vpop.f32.mrb[0].mxu0
  %v802 = vpop.f32.mrb[0].mxu0
  %v803 = vadd.f32 %v724, %v802
  %v804 = vpop.f32.mrb[0].mxu0
  %805 = vmatprep.mubr.bf16.mxu0 0
  %806 = vmatmul.mubr.bf16.gmra.mrb[0].mxu0 %v763
  %v807 = vpop.f32.mrb[0].mxu0
  %v808 = vadd.f32 %v729, %v807
  %v809 = vpop.f32.mrb[0].mxu0
  %v810 = vpop.f32.mrb[0].mxu0
  %v811 = vadd.f32 %v732, %v810
  %v812 = vpop.f32.mrb[0].mxu0
  %813 = vdwg.mxu0
  %v814 = vpack.c.bf16 %v632, %v631
  %v815 = vpack.c.bf16 %v634, %v633
  %s816 = scalar_lea.vmem %s5, 64
  %v817 = vld [vmem:[%s816] sm:$0xf]
  %v818 = vld [vmem:[%s816 + $0x4] sm:$0xf]
  %v819 = vld [vmem:[%s816 + $0x8] sm:$0xf]
  %v820 = vld [vmem:[%s816 + $0xc] sm:$0xf]
  %v821 = vld [vmem:[%s816 + $0x10] sm:$0xf]
  %v822 = vld [vmem:[%s816 + $0x14] sm:$0xf]
  %v823 = vld [vmem:[%s816 + $0x18] sm:$0xf]
  %v824 = vld [vmem:[%s816 + $0x1c] sm:$0xf]
  %v833 = vunpack.c.l.b16 %v817
  %v834 = vunpack.c.l.b16 %v818
  %v835 = vunpack.c.l.b16 %v819
  %v836 = vunpack.c.l.b16 %v820
  %v837 = vunpack.c.l.b16 %v821
  %v838 = vunpack.c.l.b16 %v822
  %v839 = vunpack.c.l.b16 %v823
  %v840 = vunpack.c.l.b16 %v824
  %v841 = vpack.c.b16 %v834, %v833
  %v842 = vpack.c.b16 %v836, %v835
  %v843 = vpack.c.b16 %v838, %v837
  %v844 = vpack.c.b16 %v840, %v839
  %v850 = vsel %vm122, %v814, 0
  %v853 = vsel %vm122, %v815, 0
  %855 = vmatprep.subr.bf16.mxu0 0
  %856 = vmatpush1.bf16.msra.mxu0 %v841
  %857 = vmatprep.subr.bf16.mxu0 0
  %858 = vmatpush1.bf16.msra.mxu0 %v842
  %859 = vmatprep.subr.bf16.mxu0 0
  %860 = vmatpush1.bf16.msra.mxu0 %v843
  %861 = vmatprep.subr.bf16.mxu0 0
  %862 = vmatpush1.bf16.msra.mxu0 %v844
  %863 = vmatprep.subr.bf16.mxu0 0
  %864 = vmatpush1.bf16.msra.mxu0 0
  %865 = vmatprep.subr.bf16.mxu0 0
  %866 = vmatpush1.bf16.msra.mxu0 0
  %867 = vmatprep.subr.bf16.mxu0 0
  %868 = vmatpush1.bf16.msra.mxu0 0
  %869 = vmatprep.subr.bf16.mxu0 0
  %870 = vmatpush1.bf16.msra.mxu0 0
  %871 = vmatprep.subr.bf16.mxu0 0
  %872 = vmatpush1.bf16.msra.mxu0 0
  %873 = vmatprep.subr.bf16.mxu0 0
  %874 = vmatpush1.bf16.msra.mxu0 0
  %875 = vmatprep.subr.bf16.mxu0 0
  %876 = vmatpush1.bf16.msra.mxu0 0
  %877 = vmatprep.subr.bf16.mxu0 0
  %878 = vmatpush1.bf16.msra.mxu0 0
  %879 = vmatprep.subr.bf16.mxu0 0
  %880 = vmatpush1.bf16.msra.mxu0 0
  %881 = vmatprep.subr.bf16.mxu0 0
  %882 = vmatpush1.bf16.msra.mxu0 0
  %883 = vmatprep.subr.bf16.mxu0 0
  %884 = vmatpush1.bf16.msra.mxu0 0
  %885 = vmatprep.subr.bf16.mxu0 0
  %886 = vmatpush1.bf16.msra.mxu0 0
  %887 = vmatprep.mubr.bf16.mxu0 0
  %888 = vmatmul.mubr.bf16.gmra.mrb[0].mxu0 %v850
  %v889 = vpop.f32.mrb[0].mxu0
  %v890 = vadd.f32 0.0, %v889
  %v891 = vpop.f32.mrb[0].mxu0
  %v892 = vpop.f32.mrb[0].mxu0
  %v893 = vadd.f32 0.0, %v892
  %v894 = vpop.f32.mrb[0].mxu0
  %895 = vmatprep.mubr.bf16.mxu0 0
  %896 = vmatmul.mubr.bf16.gmra.mrb[0].mxu0 %v853
  %v897 = vpop.f32.mrb[0].mxu0
  %v898 = vadd.f32 0.0, %v897
  %v899 = vpop.f32.mrb[0].mxu0
  %v900 = vpop.f32.mrb[0].mxu0
  %v901 = vadd.f32 0.0, %v900
  %v902 = vpop.f32.mrb[0].mxu0
  %903 = vdwg.mxu0
  %v904 = vadd.f32 %v800, %v890
  %v905 = vadd.f32 %v803, %v893
  %v906 = vadd.f32 %v808, %v898
  %v907 = vadd.f32 %v811, %v901
  %v909 = vlaneseq
  %v910 = vshrl.u32 %v909, 7
  %v911 = vsub.s32 0, %v910
  %v912 = vrot.slane %v610, %v911
  %v914 = vadd.f32 %v904, %v912
  %v915 = vadd.f32 %v905, %v912
  %v916 = vadd.f32 %v906, %v912
  %v917 = vadd.f32 %v907, %v912
  %v918 = vld [vmem:[%s7] sm:$0x1]
  %v919 = vld [vmem:[%s8] sm:$0x1]
  %v920 = vsel %vm122, %v914, 0.0
  %v921 = vsel %vm122, %v915, 0.0
  %v922 = vadd.f32 %v920, %v921
  %v923 = vsel %vm122, %v916, 0.0
  %v924 = vadd.f32 %v922, %v923
  %v925 = vsel %vm122, %v917, 0.0
  %v926 = vadd.f32 %v924, %v925
  %v927 = vrot.slane %v926, 4
  %v928 = vadd.f32 %v926, %v927
  %v929 = vrot.slane %v928, 2
  %v930 = vadd.f32 %v928, %v929
  %v931 = vrot.slane %v930, 1
  %v932 = vadd.f32 %v930, %v931
  %v933 = vmul.f32 %v914, %v914
  %v934 = vmul.f32 %v915, %v915
  %v935 = vmul.f32 %v916, %v916
  %v936 = vmul.f32 %v917, %v917
  %v937 = vsel %vm122, %v933, 0.0
  %v938 = vsel %vm122, %v934, 0.0
  %v939 = vadd.f32 %v937, %v938
  %v940 = vsel %vm122, %v935, 0.0
  %v941 = vadd.f32 %v939, %v940
  %v942 = vsel %vm122, %v936, 0.0
  %v943 = vadd.f32 %v941, %v942
  %v944 = vrot.slane %v943, 4
  %v945 = vadd.f32 %v943, %v944
  %v946 = vrot.slane %v945, 2
  %v947 = vadd.f32 %v945, %v946
  %v948 = vrot.slane %v947, 1
  %v949 = vadd.f32 %v947, %v948
  %v950 = vsel %vm393, %v932, %v949
  %v952 = vsel %vm122, %v950, 0
  %954 = vmatprep.subr.mxu0 0.0
  %955 = vmatpush1.msra.mxu0 %v395
  %956 = vmatprep.subr.mxu0 0.0
  %957 = vmatpush1.msra.mxu0 %v396
  %958 = vmatprep.subr.mxu0 0.0
  %959 = vmatpush1.msra.mxu0 %v397
  %960 = vmatprep.subr.mxu0 0.0
  %961 = vmatpush1.msra.mxu0 %v398
  %962 = vmatprep.subr.mxu0 0.0
  %963 = vmatpush1.msra.mxu0 %v399
  %964 = vmatprep.subr.mxu0 0.0
  %965 = vmatpush1.msra.mxu0 %v400
  %966 = vmatprep.subr.mxu0 0.0
  %967 = vmatpush1.msra.mxu0 %v401
  %968 = vmatprep.subr.mxu0 0.0
  %969 = vmatpush1.msra.mxu0 %v402
  %970 = vmatprep.subr.mxu0 0.0
  %971 = vmatpush1.msra.mxu0 0.0
  %972 = vmatprep.subr.mxu0 0.0
  %973 = vmatpush1.msra.mxu0 0.0
  %974 = vmatprep.subr.mxu0 0.0
  %975 = vmatpush1.msra.mxu0 0.0
  %976 = vmatprep.subr.mxu0 0.0
  %977 = vmatpush1.msra.mxu0 0.0
  %978 = vmatprep.subr.mxu0 0.0
  %979 = vmatpush1.msra.mxu0 0.0
  %980 = vmatprep.subr.mxu0 0.0
  %981 = vmatpush1.msra.mxu0 0.0
  %982 = vmatprep.subr.mxu0 0.0
  %983 = vmatpush1.msra.mxu0 0.0
  %984 = vmatprep.subr.mxu0 0.0
  %985 = vmatpush1.msra.mxu0 0.0
  %986 = vmatprep.subr.mxu0 0.0
  %987 = vmatpush1.msra.mxu0 0.0
  %988 = vmatprep.subr.mxu0 0.0
  %989 = vmatpush1.msra.mxu0 0.0
  %990 = vmatprep.subr.mxu0 0.0
  %991 = vmatpush1.msra.mxu0 0.0
  %992 = vmatprep.subr.mxu0 0.0
  %993 = vmatpush1.msra.mxu0 0.0
  %994 = vmatprep.subr.mxu0 0.0
  %995 = vmatpush1.msra.mxu0 0.0
  %996 = vmatprep.subr.mxu0 0.0
  %997 = vmatpush1.msra.mxu0 0.0
  %998 = vmatprep.subr.mxu0 0.0
  %999 = vmatpush1.msra.mxu0 0.0
  %1000 = vmatprep.subr.mxu0 0.0
  %1001 = vmatpush1.msra.mxu0 0.0
  %1002 = vmatprep.subr.mxu0 0.0
  %1003 = vmatpush1.msra.mxu0 0.0
  %1004 = vmatprep.subr.mxu0 0.0
  %1005 = vmatpush1.msra.mxu0 0.0
  %1006 = vmatprep.subr.mxu0 0.0
  %1007 = vmatpush1.msra.mxu0 0.0
  %1008 = vmatprep.subr.mxu0 0.0
  %1009 = vmatpush1.msra.mxu0 0.0
  %1010 = vmatprep.subr.mxu0 0.0
  %1011 = vmatpush1.msra.mxu0 0.0
  %1012 = vmatprep.subr.mxu0 0.0
  %1013 = vmatpush1.msra.mxu0 0.0
  %1014 = vmatprep.subr.mxu0 0.0
  %1015 = vmatpush1.msra.mxu0 0.0
  %1016 = vmatprep.subr.mxu0 0.0
  %1017 = vmatpush1.msra.mxu0 0.0
  %1018 = vmatprep.mubr.f32.mxu0 0.0
  %1019 = vmatmul.mubr.f32.gmra.mrb[0].mxu0 %v952
  %v1020 = vpop.f32.mrb[0].mxu0
  %v1021 = vadd.f32 0.0, %v1020
  %v1022 = vpop.f32.mrb[0].mxu0
  %1023 = vdwg.mxu0
  %v1024 = vmul.f32 %v1021, 0.001953125
  %v1025 = vmul.f32 %v1024, %v1024
  %v1027 = vrot.slane %v1025, 7
  %v1029 = vsub.f32 %v1024, %v1027
  %v1030 = vadd.f32 %v1029, 1e-05
  %v1031 = vrsqrt.pop %v1030
  %v1034 = vunpack.c.l.s4 1966171168
  %v1035 = vunpack.c.0.s8 %v1034
  %v1036 = vlaneseq
  %v1037 = vshrl.u32 %v1036, 7
  %v1038 = vsub.s32 %v1035, %v1037
  %v1039 = vrot.slane %v1031, %v1038
  %v1040 = vcombine.high %v1039, %v1039
  %v1042 = vunpack.c.l.s4 1966171168
  %v1043 = vunpack.c.0.s8 %v1042
  %v1044 = vlaneseq
  %v1045 = vshrl.u32 %v1044, 7
  %v1046 = vsub.s32 %v1043, %v1045
  %v1047 = vrot.slane %v1040, %v1046
  %v1049 = vmul.f32 %v918, %v1047
  %v1050 = vmul.f32 %v1024, %v1049
  %v1051 = vsub.f32 %v919, %v1050
  %v1053 = vlaneseq
  %v1054 = vshrl.u32 %v1053, 7
  %v1055 = vsub.s32 0, %v1054
  %v1056 = vrot.slane %v1051, %v1055
  %v1058 = vsel %vm393, %v1049, %v1056
  %v1060 = vsel %vm512, %v1058, 0
  %1062 = vmatprep.subr.mxu0 0.0
  %1063 = vmatpush1.msra.mxu0 %v518
  %1064 = vmatprep.subr.mxu0 0.0
  %1065 = vmatpush1.msra.mxu0 0.0
  %1066 = vmatprep.subr.mxu0 0.0
  %1067 = vmatpush1.msra.mxu0 0.0
  %1068 = vmatprep.subr.mxu0 0.0
  %1069 = vmatpush1.msra.mxu0 0.0
  %1070 = vmatprep.subr.mxu0 0.0
  %1071 = vmatpush1.msra.mxu0 0.0
  %1072 = vmatprep.subr.mxu0 0.0
  %1073 = vmatpush1.msra.mxu0 0.0
  %1074 = vmatprep.subr.mxu0 0.0
  %1075 = vmatpush1.msra.mxu0 0.0
  %1076 = vmatprep.subr.mxu0 0.0
  %1077 = vmatpush1.msra.mxu0 0.0
  %1078 = vmatprep.subr.mxu0 0.0
  %1079 = vmatpush1.msra.mxu0 0.0
  %1080 = vmatprep.subr.mxu0 0.0
  %1081 = vmatpush1.msra.mxu0 0.0
  %1082 = vmatprep.subr.mxu0 0.0
  %1083 = vmatpush1.msra.mxu0 0.0
  %1084 = vmatprep.subr.mxu0 0.0
  %1085 = vmatpush1.msra.mxu0 0.0
  %1086 = vmatprep.subr.mxu0 0.0
  %1087 = vmatpush1.msra.mxu0 0.0
  %1088 = vmatprep.subr.mxu0 0.0
  %1089 = vmatpush1.msra.mxu0 0.0
  %1090 = vmatprep.subr.mxu0 0.0
  %1091 = vmatpush1.msra.mxu0 0.0
  %1092 = vmatprep.subr.mxu0 0.0
  %1093 = vmatpush1.msra.mxu0 0.0
  %1094 = vmatprep.subr.mxu0 0.0
  %1095 = vmatpush1.msra.mxu0 0.0
  %1096 = vmatprep.subr.mxu0 0.0
  %1097 = vmatpush1.msra.mxu0 0.0
  %1098 = vmatprep.subr.mxu0 0.0
  %1099 = vmatpush1.msra.mxu0 0.0
  %1100 = vmatprep.subr.mxu0 0.0
  %1101 = vmatpush1.msra.mxu0 0.0
  %1102 = vmatprep.subr.mxu0 0.0
  %1103 = vmatpush1.msra.mxu0 0.0
  %1104 = vmatprep.subr.mxu0 0.0
  %1105 = vmatpush1.msra.mxu0 0.0
  %1106 = vmatprep.subr.mxu0 0.0
  %1107 = vmatpush1.msra.mxu0 0.0
  %1108 = vmatprep.subr.mxu0 0.0
  %1109 = vmatpush1.msra.mxu0 0.0
  %1110 = vmatprep.subr.mxu0 0.0
  %1111 = vmatpush1.msra.mxu0 0.0
  %1112 = vmatprep.subr.mxu0 0.0
  %1113 = vmatpush1.msra.mxu0 0.0
  %1114 = vmatprep.subr.mxu0 0.0
  %1115 = vmatpush1.msra.mxu0 0.0
  %1116 = vmatprep.subr.mxu0 0.0
  %1117 = vmatpush1.msra.mxu0 0.0
  %1118 = vmatprep.subr.mxu0 0.0
  %1119 = vmatpush1.msra.mxu0 0.0
  %1120 = vmatprep.subr.mxu0 0.0
  %1121 = vmatpush1.msra.mxu0 0.0
  %1122 = vmatprep.subr.mxu0 0.0
  %1123 = vmatpush1.msra.mxu0 0.0
  %1124 = vmatprep.subr.mxu0 0.0
  %1125 = vmatpush1.msra.mxu0 0.0
  %1126 = vmatprep.mubr.f32.mxu0 0.0
  %1127 = vmatmul.mubr.f32.gmra.mrb[0].mxu0 %v1060
  %v1128 = vpop.f32.mrb[0].mxu0
  %v1129 = vadd.f32 0.0, %v1128
  %v1130 = vpop.f32.mrb[0].mxu0
  %1131 = vdwg.mxu0
  %v1132 = vlaneseq
  %v1133 = vshrl.u32 %v1132, 7
  %v1134 = vsub.s32 0, %v1133
  %v1135 = vrot.slane %v1129, %v1134
  %v1136 = vmul.f32 %v914, %v1135
  %v1137 = vmul.f32 %v915, %v1135
  %v1138 = vmul.f32 %v916, %v1135
  %v1139 = vmul.f32 %v917, %v1135
  %v1140 = vlaneseq
  %v1141 = vshrl.u32 %v1140, 7
  %v1142 = vsub.s32 1, %v1141
  %v1143 = vrot.slane %v1129, %v1142
  %v1144 = vadd.f32 %v1136, %v1143
  %v1145 = vadd.f32 %v1137, %v1143
  %v1146 = vadd.f32 %v1138, %v1143
  %v1147 = vadd.f32 %v1139, %v1143
  %v1148 = vadd.f32 %v1144, %v39
  %v1149 = vadd.f32 %v1145, %v40
  %v1150 = vadd.f32 %v1146, %v41
  %v1151 = vadd.f32 %v1147, %v42
  %v1152 = vmax.f32 %v1148, 0.0
  %v1153 = vmax.f32 %v1149, 0.0
  %v1154 = vmax.f32 %v1150, 0.0
  %v1155 = vmax.f32 %v1151, 0.0
  %1156 = vst.msk [vmem:[%s11] sm:$0xff] %vm122, %v1152
  %1157 = vst.msk [vmem:[%s11 + $0x8] sm:$0xff] %vm122, %v1153
  %1158 = vst.msk [vmem:[%s11 + $0x10] sm:$0xff] %vm122, %v1154
  %1159 = vst.msk [vmem:[%s11 + $0x18] sm:$0xff] %vm122, %v1155
  // Predicated region
  $region46: #{residual_block.1} parent=0 // pred_check
    _
  $region47: #{residual_block.1} parent=0 // pred_check_branch
    %1161 = sbr.rel (0) target = $region49
  $region48: #{residual_block.1} parent=0 // pred_region
    _
  $region49: #{residual_block.1} parent=0 // pred_fallthru
    _
  // Predicated region
  $region50: #{residual_block.1} parent=0 // pred_check
    _
  $region51: #{residual_block.1} parent=0 // pred_check_branch
    %1163 = sbr.rel (0) target = $region53
  $region52: #{residual_block.1} parent=0 // pred_region
    _
  $region53: #{residual_block.1} parent=0 // pred_fallthru
    _

</llo_original>
